<compile_context>
chip_gen: v5e
topology: v5e:2x2
jax: 0.10.0
libtpu: 0.0.40
codegen_flags: <defaults>
</compile_context>

<pallas_src>
import functools

import jax
import jax.numpy as jnp
from jax import lax
from jax.experimental import pallas as pl
from jax.experimental.pallas import tpu as pltpu


def _round_up(x: int, m: int) -> int:
    return ((x + m - 1) // m) * m


def _tpu_vmem_and_cores():
    """Best-effort (VMEM bytes, TensorCores/device); safe fallbacks off-TPU."""
    cap, cores = 64 * 1024 * 1024, 1          # conservative: v7x per-core VMEM
    try:
        info = pltpu.get_tpu_info()
    except Exception:
        return cap, cores
    c = getattr(info, "vmem_capacity_bytes", None)
    if c:
        cap = int(c)
    for name in ("num_cores", "core_count", "tensorcore_count", "num_tensorcores"):
        v = getattr(info, name, None)
        if v:
            cores = int(v)
            break
    return cap, cores


def _const_block_spec(shape, index_map):
    """BlockSpec for a grid-invariant operand; single-buffered when supported."""
    if hasattr(pl, "Buffered"):
        try:
            return pl.BlockSpec(shape, index_map, pipeline_mode=pl.Buffered(1))
        except TypeError:
            pass
    return pl.BlockSpec(shape, index_map)


def lstm_chunk_kernel(len_ref, x_ref, wih_ref, b_ref, whh_ref, out_ref,
                      gx_sc, h_sc, c_sc):
    """One grid step == t_chunk timesteps of the LSTM recurrence.

    Grid = (batch_blocks ["parallel"], time_chunks ["arbitrary"]).
      len_ref: (Bblk, 1)        int32 valid lengths
      x_ref:   (T, Bblk, D)     time-major input chunk (matmul dtype)
      wih_ref: (D, 4*Hp)        input-proj weights (transposed, gate-aligned)
      b_ref:   (1, 4*Hp)        f32 fused bias (b_ih + b_hh)
      whh_ref: (Hp, 4*Hp)       recurrent weights (transposed, gate-aligned)
      out_ref: (Bblk, T*Hp)     batch-major, lane-flattened output block
      gx_sc:   (T, Bblk, 4*Hp)  VMEM scratch for projected inputs
      h_sc/c_sc: (Bblk, Hp)     f32 state, carried across time chunks
    """
    c_idx = pl.program_id(1)
    T, Bblk, D = x_ref.shape
    Hp = h_sc.shape[-1]
    mm_dtype = whh_ref.dtype

    @pl.when(c_idx == 0)
    def _():
        h_sc[...] = jnp.zeros_like(h_sc)
        c_sc[...] = jnp.zeros_like(c_sc)

    # Chunk prologue: ONE MXU matmul projects all T timesteps of this chunk.
    # (Bblk % 8 == 0, so the leading-dim merge/split reshapes are layout-free.)
    x2 = x_ref[...].reshape(T * Bblk, D)
    proj = jnp.dot(x2, wih_ref[...], preferred_element_type=jnp.float32)
    proj = proj + b_ref[...]                                    # (T*Bblk, 4*Hp)
    gx_sc[...] = proj.reshape(T, Bblk, 4 * Hp).astype(gx_sc.dtype)

    lens = len_ref[...]                                         # (Bblk, 1) int32
    t0 = c_idx * T

    h = h_sc[...]
    c = c_sc[...]
    # Static Python loop: gx reads and output stores use static, lane-aligned
    # slices.  t_chunk bounds the unroll (lower it for very large Hp).
    for t in range(T):
        # Only the recurrent matmul sits on the serial critical path.
        gates = gx_sc[t].astype(jnp.float32) + jnp.dot(
            h.astype(mm_dtype), whh_ref[...], preferred_element_type=jnp.float32)
        sig = jax.nn.sigmoid(gates[:, : 3 * Hp])     # i, f, o: one contiguous slab
        i_g = sig[:, 0 * Hp:1 * Hp]
        f_g = sig[:, 1 * Hp:2 * Hp]
        o_g = sig[:, 2 * Hp:3 * Hp]
        g_g = jnp.tanh(gates[:, 3 * Hp:4 * Hp])
        c = f_g * c + i_g * g_g
        h = o_g * jnp.tanh(c)
        # pack/pad semantics: zero outputs past each sequence's length.
        masked = jnp.where((t0 + t) < lens, h, 0.0)
        out_ref[:, t * Hp:(t + 1) * Hp] = masked.astype(out_ref.dtype)
    h_sc[...] = h
    c_sc[...] = c


def seq2seq_encoder_forward(x_bsd, lengths, w_ih, w_hh, b_ih, b_hh, *,
                            t_chunk=None, b_block=None,
                            matmul_dtype=jnp.bfloat16, max_length=None):
    """
    x_bsd:   (B, S, D) float32, batch-first padded sequences.
    lengths: (B,) int valid lengths.
    w_ih: (4H, D), w_hh: (4H, H), b_ih/b_hh: (4H,)  (PyTorch nn.LSTM shapes).
    Returns (B, max_length or S, H) float32, zero-padded past each length.
    """
    B, S, D = x_bsd.shape
    H = w_hh.shape[1]
    Hp = _round_up(H, 128)                          # lane-aligned gate blocks
    mm_isz = jnp.dtype(matmul_dtype).itemsize

    vmem_cap, num_cores = _tpu_vmem_and_cores()

    # --- generation-aware tile sizing -------------------------------------
    if b_block is None:
        cap = 256 if B >= 256 else 128              # bigger LHS rows on big batch
        b_block = min(_round_up(B, 8), cap)
        # 2 TensorCores (v7x): make sure the "parallel" batch axis has >=2 blocks.
        if num_cores >= 2 and B > 8 and _round_up(B, b_block) // b_block < 2:
            b_block = max(8, _round_up(-(-B // num_cores), 8))
    b_block = _round_up(max(8, b_block), 8)

    if t_chunk is None:
        t_chunk = 32                                # amortize per-grid-step cost
    t_chunk = max(8, _round_up(min(t_chunk, _round_up(S, 8)), 8))

    def _estimate(tc, bb):
        return (2 * tc * bb * D * mm_isz            # x blocks (double buffered)
                + 2 * bb * tc * Hp * 4              # out blocks (f32)
                + D * 4 * Hp * mm_isz               # W_ih^T (single buffer)
                + Hp * 4 * Hp * mm_isz              # W_hh^T (single buffer)
                + 4 * Hp * 4                        # bias
                + 2 * bb * 128 * 4                  # lengths (lane padded)
                + tc * bb * 4 * Hp * mm_isz         # gx scratch
                + 2 * bb * Hp * 4)                  # h/c state

    budget = int(vmem_cap * 0.8)                    # 64 MiB v7x vs 128 MiB v5e/v6e
    while _estimate(t_chunk, b_block) > budget and t_chunk > 8:
        t_chunk = _round_up(max(8, t_chunk // 2), 8)
    while _estimate(t_chunk, b_block) > budget and b_block > 8:
        b_block = _round_up(max(8, b_block // 2), 8)

    Bp = _round_up(B, b_block)
    Sp = _round_up(S, t_chunk)
    nb, nc = Bp // b_block, Sp // t_chunk

    est = _estimate(t_chunk, b_block)
    vmem_limit = None
    if est > 12 * 1024 * 1024:
        vmem_limit = min(int(est * 1.3), int(vmem_cap * 0.85))

    # --- weight prep: PyTorch gate order (i,f,g,o) -> (i,f,o,g), pad to Hp ---
    perm = jnp.array([0, 1, 3, 2])
    w_ih_g = w_ih.reshape(4, H, D)[perm]
    w_hh_g = w_hh.reshape(4, H, H)[perm]
    b_g = (b_ih + b_hh).reshape(4, H)[perm]

    w_ih_p = jnp.pad(w_ih_g, ((0, 0), (0, Hp - H), (0, 0)))        # (4, Hp, D)
    w_hh_p = jnp.pad(w_hh_g, ((0, 0), (0, Hp - H), (0, Hp - H)))   # (4, Hp, Hp)
    b_p = jnp.pad(b_g, ((0, 0), (0, Hp - H))).reshape(1, 4 * Hp).astype(jnp.float32)

    wih_t = w_ih_p.reshape(4 * Hp, D).T.astype(matmul_dtype)       # (D, 4*Hp)
    whh_t = w_hh_p.reshape(4 * Hp, Hp).T.astype(matmul_dtype)      # (Hp, 4*Hp)

    # Pad + time-major transpose + (optional) bf16 cast fuse into one XLA pass;
    # x carries D bytes/element (no 4H-wide gx tensor ever touches HBM).
    x_p = jnp.pad(x_bsd.astype(jnp.float32), ((0, Bp - B), (0, Sp - S), (0, 0)))
    x_tm = jnp.transpose(x_p, (1, 0, 2)).astype(matmul_dtype)      # (Sp, Bp, D)

    len_p = jnp.pad(lengths.astype(jnp.int32), (0, Bp - B)).reshape(Bp, 1)

    out = pl.pallas_call(
        lstm_chunk_kernel,
        out_shape=jax.ShapeDtypeStruct((Bp, Sp * Hp), jnp.float32),
        grid_spec=pltpu.PrefetchScalarGridSpec(
            num_scalar_prefetch=0,
            grid=(nb, nc),
            in_specs=[
                pl.BlockSpec((b_block, 1), lambda i, c: (i, 0)),               # lengths
                pl.BlockSpec((t_chunk, b_block, D), lambda i, c: (c, i, 0)),   # x chunk
                _const_block_spec((D, 4 * Hp), lambda i, c: (0, 0)),           # W_ih^T
                _const_block_spec((1, 4 * Hp), lambda i, c: (0, 0)),           # bias
                _const_block_spec((Hp, 4 * Hp), lambda i, c: (0, 0)),          # W_hh^T
            ],
            # Batch-major, lane-flattened output: dense 128-lane stores in-kernel,
            # one contiguous DMA per chunk, and no post-kernel transpose pass.
            out_specs=pl.BlockSpec((b_block, t_chunk * Hp), lambda i, c: (i, c)),
            scratch_shapes=[
                pltpu.VMEM((t_chunk, b_block, 4 * Hp), matmul_dtype),  # gx chunk
                pltpu.VMEM((b_block, Hp), jnp.float32),                # h state
                pltpu.VMEM((b_block, Hp), jnp.float32),                # c state
            ],
        ),
        compiler_params=pltpu.CompilerParams(
            dimension_semantics=("parallel", "arbitrary"),  # batch || cores, time serial
            vmem_limit_bytes=vmem_limit,
        ),
    )(len_p, x_tm, wih_t, b_p, whh_t)

    out = out.reshape(Bp, Sp, Hp)[:B, :, :H]        # reshape is layout-free
    t_ret = S if max_length is None else max_length
    return out[:, :t_ret]


def _reference_lstm(x_bsd, lengths, w_ih, w_hh, b_ih, b_hh, max_length):
    """Pure-JAX reference matching PyTorch LSTM + pack/pad semantics."""
    B, S, D = x_bsd.shape
    H = w_hh.shape[1]
    bias = b_ih + b_hh

    def step(carry, x_t):
        h, c = carry
        gates = x_t @ w_ih.T + h @ w_hh.T + bias
        i, f, g, o = jnp.split(gates, 4, axis=-1)
        i, f, o = jax.nn.sigmoid(i), jax.nn.sigmoid(f), jax.nn.sigmoid(o)
        g = jnp.tanh(g)
        c = f * c + i * g
        h = o * jnp.tanh(c)
        return (h, c), h

    init = (jnp.zeros((B, H), jnp.float32), jnp.zeros((B, H), jnp.float32))
    _, hs = lax.scan(step, init, jnp.swapaxes(x_bsd, 0, 1))
    hs = jnp.swapaxes(hs, 0, 1)                              # (B, S, H)
    mask = (jnp.arange(S)[None, :] < lengths[:, None])[:, :, None]
    return jnp.where(mask, hs, 0.0)[:, :max_length]


if __name__ == "__main__":
    # Small shapes consistent with the module: batch=2, seq=8, input=16, hidden=32.
    B, S, D, H = 2, 8, 16, 32

    key = jax.random.PRNGKey(0)
    k1, k2, k3, k4, k5 = jax.random.split(key, 5)
    scale = 1.0 / jnp.sqrt(jnp.float32(H))       # PyTorch default init range
    w_ih = jax.random.uniform(k1, (4 * H, D), jnp.float32, -scale, scale)
    w_hh = jax.random.uniform(k2, (4 * H, H), jnp.float32, -scale, scale)
    b_ih = jax.random.uniform(k3, (4 * H,), jnp.float32, -scale, scale)
    b_hh = jax.random.uniform(k4, (4 * H,), jnp.float32, -scale, scale)

    x = jax.random.normal(k5, (B, S, D), jnp.float32)
    lengths = jnp.array([8, 5], dtype=jnp.int32)

    # pad_packed_sequence length resolved on the host, OUTSIDE the jitted forward.
    t_max = int(jax.device_get(lengths).max())
    ref = _reference_lstm(x, lengths, w_ih, w_hh, b_ih, b_hh, t_max)

    # f32 MXU path: tight tolerance vs the f32 reference.
    fwd_f32 = jax.jit(functools.partial(
        seq2seq_encoder_forward, matmul_dtype=jnp.float32, max_length=t_max))
    out_f32 = jax.block_until_ready(fwd_f32(x, lengths, w_ih, w_hh, b_ih, b_hh))
    assert out_f32.shape == ref.shape, (out_f32.shape, ref.shape)
    assert jnp.allclose(out_f32, ref, atol=1e-5, rtol=1e-5), "f32 mismatch vs reference"

    # Default bf16 MXU path (f32 accumulation): relaxed tolerance.
    fwd_bf16 = jax.jit(functools.partial(seq2seq_encoder_forward, max_length=t_max))
    out_bf16 = jax.block_until_ready(fwd_bf16(x, lengths, w_ih, w_hh, b_ih, b_hh))
    assert out_bf16.shape == ref.shape, (out_bf16.shape, ref.shape)
    assert jnp.allclose(out_bf16, ref, atol=3e-2, rtol=3e-2), "bf16 mismatch vs reference"

    print("KERNEL_OK")
</pallas_src>

<mosaic_0001>
module attributes {stable_mosaic.version = 11 : i64} {
  func.func @lstm_chunk_kernel(%arg0: i32, %arg1: i32, %arg2: memref<8x1xi32, #tpu.memory_space<vmem>>, %arg3: memref<8x8x16xf32, #tpu.memory_space<vmem>>, %arg4: memref<16x512xf32, #tpu.memory_space<vmem>>, %arg5: memref<1x512xf32, #tpu.memory_space<vmem>>, %arg6: memref<128x512xf32, #tpu.memory_space<vmem>>, %arg7: memref<8x1024xf32, #tpu.memory_space<vmem>>, %arg8: memref<8x8x512xf32, #tpu.memory_space<vmem>>, %arg9: memref<8x128xf32, #tpu.memory_space<vmem>>, %arg10: memref<8x128xf32, #tpu.memory_space<vmem>>) attributes {dimension_semantics = [#tpu.dimension_semantics<parallel>, #tpu.dimension_semantics<arbitrary>], iteration_bounds = array<i64: 1, 1>, scalar_prefetch = 0 : i64, scratch_operands = 3 : i64, tpu.core_type = #tpu.core_type<tc>, window_params = [{transform_indices = @transform_0, window_bounds = array<i64: 8, 1>}, {transform_indices = @transform_1, window_bounds = array<i64: 8, 8, 16>}, {pipeline_mode = #tpu.pipeline_mode<synchronous>, transform_indices = @transform_2, window_bounds = array<i64: 16, 512>}, {pipeline_mode = #tpu.pipeline_mode<synchronous>, transform_indices = @transform_3, window_bounds = array<i64: 1, 512>}, {pipeline_mode = #tpu.pipeline_mode<synchronous>, transform_indices = @transform_4, window_bounds = array<i64: 128, 512>}, {transform_indices = @transform_5, window_bounds = array<i64: 8, 1024>}]} {
    %c0_i32 = arith.constant 0 : i32
    %0 = arith.cmpi eq, %arg1, %c0_i32 : i32
    %1 = arith.extui %0 : i1 to i32
    %c0_i32_0 = arith.constant 0 : i32
    %2 = arith.cmpi ne, %1, %c0_i32_0 : i32
    scf.if %2 {
      %cst_87 = arith.constant 0.000000e+00 : f32
      %250 = vector.broadcast %cst_87 : f32 to vector<8x128xf32>
      %c0_88 = arith.constant 0 : index
      %c0_89 = arith.constant 0 : index
      %251 = vector.load %arg9[%c0_88, %c0_89] : memref<8x128xf32, #tpu.memory_space<vmem>>, vector<8x128xf32>
      tpu.vector_store %arg9[%c0_88, %c0_89], %250 {strides = array<i32>} : memref<8x128xf32, #tpu.memory_space<vmem>>, vector<8x128xf32>,
      %cst_90 = arith.constant 0.000000e+00 : f32
      %252 = vector.broadcast %cst_90 : f32 to vector<8x128xf32>
      %c0_91 = arith.constant 0 : index
      %c0_92 = arith.constant 0 : index
      %253 = vector.load %arg10[%c0_91, %c0_92] : memref<8x128xf32, #tpu.memory_space<vmem>>, vector<8x128xf32>
      tpu.vector_store %arg10[%c0_91, %c0_92], %252 {strides = array<i32>} : memref<8x128xf32, #tpu.memory_space<vmem>>, vector<8x128xf32>,
    } else {
    }
    %c0 = arith.constant 0 : index
    %c0_1 = arith.constant 0 : index
    %c0_2 = arith.constant 0 : index
    %3 = vector.load %arg3[%c0, %c0_1, %c0_2] : memref<8x8x16xf32, #tpu.memory_space<vmem>>, vector<8x8x16xf32>
    %4 = vector.shape_cast %3 : vector<8x8x16xf32> to vector<64x16xf32>
    %c0_3 = arith.constant 0 : index
    %c0_4 = arith.constant 0 : index
    %5 = vector.load %arg4[%c0_3, %c0_4] : memref<16x512xf32, #tpu.memory_space<vmem>>, vector<16x512xf32>
    %cst = arith.constant dense<0.000000e+00> : vector<64x512xf32>
    %6 = tpu.matmul %4, %5, %cst {dimension_numbers = #tpu.dot_dimension_numbers<[1], [0], [0], [1], [0, 0, 1, 1], [], []>} : vector<64x16xf32>, vector<16x512xf32>, vector<64x512xf32> -> vector<64x512xf32>
    %c0_5 = arith.constant 0 : index
    %c0_6 = arith.constant 0 : index
    %7 = vector.load %arg5[%c0_5, %c0_6] : memref<1x512xf32, #tpu.memory_space<vmem>>, vector<1x512xf32>
    %8 = vector.broadcast %7 : vector<1x512xf32> to vector<64x512xf32>
    %9 = arith.addf %6, %8 : vector<64x512xf32>
    %10 = vector.shape_cast %9 : vector<64x512xf32> to vector<8x8x512xf32>
    %c0_7 = arith.constant 0 : index
    %c0_8 = arith.constant 0 : index
    %c0_9 = arith.constant 0 : index
    %11 = vector.load %arg8[%c0_7, %c0_8, %c0_9] : memref<8x8x512xf32, #tpu.memory_space<vmem>>, vector<8x8x512xf32>
    tpu.vector_store %arg8[%c0_7, %c0_8, %c0_9], %10 {strides = array<i32>} : memref<8x8x512xf32, #tpu.memory_space<vmem>>, vector<8x8x512xf32>,
    %c0_10 = arith.constant 0 : index
    %c0_11 = arith.constant 0 : index
    %12 = vector.load %arg2[%c0_10, %c0_11] : memref<8x1xi32, #tpu.memory_space<vmem>>, vector<8x1xi32>
    %c8_i32 = arith.constant 8 : i32
    %13 = arith.muli %arg1, %c8_i32 : i32
    %c0_12 = arith.constant 0 : index
    %c0_13 = arith.constant 0 : index
    %14 = vector.load %arg9[%c0_12, %c0_13] : memref<8x128xf32, #tpu.memory_space<vmem>>, vector<8x128xf32>
    %c0_14 = arith.constant 0 : index
    %c0_15 = arith.constant 0 : index
    %15 = vector.load %arg10[%c0_14, %c0_15] : memref<8x128xf32, #tpu.memory_space<vmem>>, vector<8x128xf32>
    %c0_16 = arith.constant 0 : index
    %c0_17 = arith.constant 0 : index
    %c0_18 = arith.constant 0 : index
    %16 = vector.load %arg8[%c0_16, %c0_17, %c0_18] : memref<8x8x512xf32, #tpu.memory_space<vmem>>, vector<1x8x512xf32>
    %17 = vector.shape_cast %16 : vector<1x8x512xf32> to vector<8x512xf32>
    %c0_19 = arith.constant 0 : index
    %c0_20 = arith.constant 0 : index
    %18 = vector.load %arg6[%c0_19, %c0_20] : memref<128x512xf32, #tpu.memory_space<vmem>>, vector<128x512xf32>
    %cst_21 = arith.constant dense<0.000000e+00> : vector<8x512xf32>
    %19 = tpu.matmul %14, %18, %cst_21 {dimension_numbers = #tpu.dot_dimension_numbers<[1], [0], [0], [1], [0, 0, 1, 1], [], []>} : vector<8x128xf32>, vector<128x512xf32>, vector<8x512xf32> -> vector<8x512xf32>
    %20 = arith.addf %17, %19 : vector<8x512xf32>
    %21 = vector.extract_strided_slice %20 {offsets = [0, 0], sizes = [8, 384], strides = [1, 1]} : vector<8x512xf32> to vector<8x384xf32>
    %22 = arith.negf %21 : vector<8x384xf32>
    %23 = math.exp %22 : vector<8x384xf32>
    %cst_22 = arith.constant 1.000000e+00 : f32
    %24 = vector.broadcast %cst_22 : f32 to vector<8x384xf32>
    %25 = arith.addf %24, %23 : vector<8x384xf32>
    %26 = arith.divf %24, %25 : vector<8x384xf32>
    %27 = vector.extract_strided_slice %26 {offsets = [0, 0], sizes = [8, 128], strides = [1, 1]} : vector<8x384xf32> to vector<8x128xf32>
    %28 = vector.extract_strided_slice %26 {offsets = [0, 128], sizes = [8, 128], strides = [1, 1]} : vector<8x384xf32> to vector<8x128xf32>
    %29 = vector.extract_strided_slice %26 {offsets = [0, 256], sizes = [8, 128], strides = [1, 1]} : vector<8x384xf32> to vector<8x128xf32>
    %30 = vector.extract_strided_slice %20 {offsets = [0, 384], sizes = [8, 128], strides = [1, 1]} : vector<8x512xf32> to vector<8x128xf32>
    %31 = math.tanh %30 : vector<8x128xf32>
    %32 = arith.mulf %28, %15 : vector<8x128xf32>
    %33 = arith.mulf %27, %31 : vector<8x128xf32>
    %34 = arith.addf %32, %33 : vector<8x128xf32>
    %35 = math.tanh %34 : vector<8x128xf32>
    %36 = arith.mulf %29, %35 : vector<8x128xf32>
    %c0_i32_23 = arith.constant 0 : i32
    %37 = arith.addi %13, %c0_i32_23 : i32
    %38 = vector.broadcast %37 : i32 to vector<8x1xi32>
    %39 = arith.cmpi slt, %38, %12 : vector<8x1xi32>
    %cst_24 = arith.constant 0.000000e+00 : f32
    %40 = vector.shape_cast %39 : vector<8x1xi1> to vector<8x1xi1>
    %41 = vector.broadcast %40 : vector<8x1xi1> to vector<8x128xi1>
    %42 = vector.broadcast %cst_24 : f32 to vector<8x128xf32>
    %43 = arith.select %41, %36, %42 : vector<8x128xi1>, vector<8x128xf32>
    %c0_25 = arith.constant 0 : index
    %c0_26 = arith.constant 0 : index
    %44 = vector.load %arg7[%c0_25, %c0_26] : memref<8x1024xf32, #tpu.memory_space<vmem>>, vector<8x128xf32>
    tpu.vector_store %arg7[%c0_25, %c0_26], %43 {strides = array<i32>} : memref<8x1024xf32, #tpu.memory_space<vmem>>, vector<8x128xf32>,
    %c1 = arith.constant 1 : index
    %c0_27 = arith.constant 0 : index
    %c0_28 = arith.constant 0 : index
    %45 = vector.load %arg8[%c1, %c0_27, %c0_28] : memref<8x8x512xf32, #tpu.memory_space<vmem>>, vector<1x8x512xf32>
    %46 = vector.shape_cast %45 : vector<1x8x512xf32> to vector<8x512xf32>
    %c0_29 = arith.constant 0 : index
    %c0_30 = arith.constant 0 : index
    %47 = vector.load %arg6[%c0_29, %c0_30] : memref<128x512xf32, #tpu.memory_space<vmem>>, vector<128x512xf32>
    %cst_31 = arith.constant dense<0.000000e+00> : vector<8x512xf32>
    %48 = tpu.matmul %36, %47, %cst_31 {dimension_numbers = #tpu.dot_dimension_numbers<[1], [0], [0], [1], [0, 0, 1, 1], [], []>} : vector<8x128xf32>, vector<128x512xf32>, vector<8x512xf32> -> vector<8x512xf32>
    %49 = arith.addf %46, %48 : vector<8x512xf32>
    %50 = vector.extract_strided_slice %49 {offsets = [0, 0], sizes = [8, 384], strides = [1, 1]} : vector<8x512xf32> to vector<8x384xf32>
    %51 = arith.negf %50 : vector<8x384xf32>
    %52 = math.exp %51 : vector<8x384xf32>
    %cst_32 = arith.constant 1.000000e+00 : f32
    %53 = vector.broadcast %cst_32 : f32 to vector<8x384xf32>
    %54 = arith.addf %53, %52 : vector<8x384xf32>
    %55 = arith.divf %53, %54 : vector<8x384xf32>
    %56 = vector.extract_strided_slice %55 {offsets = [0, 0], sizes = [8, 128], strides = [1, 1]} : vector<8x384xf32> to vector<8x128xf32>
    %57 = vector.extract_strided_slice %55 {offsets = [0, 128], sizes = [8, 128], strides = [1, 1]} : vector<8x384xf32> to vector<8x128xf32>
    %58 = vector.extract_strided_slice %55 {offsets = [0, 256], sizes = [8, 128], strides = [1, 1]} : vector<8x384xf32> to vector<8x128xf32>
    %59 = vector.extract_strided_slice %49 {offsets = [0, 384], sizes = [8, 128], strides = [1, 1]} : vector<8x512xf32> to vector<8x128xf32>
    %60 = math.tanh %59 : vector<8x128xf32>
    %61 = arith.mulf %57, %34 : vector<8x128xf32>
    %62 = arith.mulf %56, %60 : vector<8x128xf32>
    %63 = arith.addf %61, %62 : vector<8x128xf32>
    %64 = math.tanh %63 : vector<8x128xf32>
    %65 = arith.mulf %58, %64 : vector<8x128xf32>
    %c1_i32 = arith.constant 1 : i32
    %66 = arith.addi %13, %c1_i32 : i32
    %67 = vector.broadcast %66 : i32 to vector<8x1xi32>
    %68 = arith.cmpi slt, %67, %12 : vector<8x1xi32>
    %cst_33 = arith.constant 0.000000e+00 : f32
    %69 = vector.shape_cast %68 : vector<8x1xi1> to vector<8x1xi1>
    %70 = vector.broadcast %69 : vector<8x1xi1> to vector<8x128xi1>
    %71 = vector.broadcast %cst_33 : f32 to vector<8x128xf32>
    %72 = arith.select %70, %65, %71 : vector<8x128xi1>, vector<8x128xf32>
    %c0_34 = arith.constant 0 : index
    %c128 = arith.constant 128 : index
    %73 = vector.load %arg7[%c0_34, %c128] : memref<8x1024xf32, #tpu.memory_space<vmem>>, vector<8x128xf32>
    tpu.vector_store %arg7[%c0_34, %c128], %72 {strides = array<i32>} : memref<8x1024xf32, #tpu.memory_space<vmem>>, vector<8x128xf32>,
    %c2 = arith.constant 2 : index
    %c0_35 = arith.constant 0 : index
    %c0_36 = arith.constant 0 : index
    %74 = vector.load %arg8[%c2, %c0_35, %c0_36] : memref<8x8x512xf32, #tpu.memory_space<vmem>>, vector<1x8x512xf32>
    %75 = vector.shape_cast %74 : vector<1x8x512xf32> to vector<8x512xf32>
    %c0_37 = arith.constant 0 : index
    %c0_38 = arith.constant 0 : index
    %76 = vector.load %arg6[%c0_37, %c0_38] : memref<128x512xf32, #tpu.memory_space<vmem>>, vector<128x512xf32>
    %cst_39 = arith.constant dense<0.000000e+00> : vector<8x512xf32>
    %77 = tpu.matmul %65, %76, %cst_39 {dimension_numbers = #tpu.dot_dimension_numbers<[1], [0], [0], [1], [0, 0, 1, 1], [], []>} : vector<8x128xf32>, vector<128x512xf32>, vector<8x512xf32> -> vector<8x512xf32>
    %78 = arith.addf %75, %77 : vector<8x512xf32>
    %79 = vector.extract_strided_slice %78 {offsets = [0, 0], sizes = [8, 384], strides = [1, 1]} : vector<8x512xf32> to vector<8x384xf32>
    %80 = arith.negf %79 : vector<8x384xf32>
    %81 = math.exp %80 : vector<8x384xf32>
    %cst_40 = arith.constant 1.000000e+00 : f32
    %82 = vector.broadcast %cst_40 : f32 to vector<8x384xf32>
    %83 = arith.addf %82, %81 : vector<8x384xf32>
    %84 = arith.divf %82, %83 : vector<8x384xf32>
    %85 = vector.extract_strided_slice %84 {offsets = [0, 0], sizes = [8, 128], strides = [1, 1]} : vector<8x384xf32> to vector<8x128xf32>
    %86 = vector.extract_strided_slice %84 {offsets = [0, 128], sizes = [8, 128], strides = [1, 1]} : vector<8x384xf32> to vector<8x128xf32>
    %87 = vector.extract_strided_slice %84 {offsets = [0, 256], sizes = [8, 128], strides = [1, 1]} : vector<8x384xf32> to vector<8x128xf32>
    %88 = vector.extract_strided_slice %78 {offsets = [0, 384], sizes = [8, 128], strides = [1, 1]} : vector<8x512xf32> to vector<8x128xf32>
    %89 = math.tanh %88 : vector<8x128xf32>
    %90 = arith.mulf %86, %63 : vector<8x128xf32>
    %91 = arith.mulf %85, %89 : vector<8x128xf32>
    %92 = arith.addf %90, %91 : vector<8x128xf32>
    %93 = math.tanh %92 : vector<8x128xf32>
    %94 = arith.mulf %87, %93 : vector<8x128xf32>
    %c2_i32 = arith.constant 2 : i32
    %95 = arith.addi %13, %c2_i32 : i32
    %96 = vector.broadcast %95 : i32 to vector<8x1xi32>
    %97 = arith.cmpi slt, %96, %12 : vector<8x1xi32>
    %cst_41 = arith.constant 0.000000e+00 : f32
    %98 = vector.shape_cast %97 : vector<8x1xi1> to vector<8x1xi1>
    %99 = vector.broadcast %98 : vector<8x1xi1> to vector<8x128xi1>
    %100 = vector.broadcast %cst_41 : f32 to vector<8x128xf32>
    %101 = arith.select %99, %94, %100 : vector<8x128xi1>, vector<8x128xf32>
    %c0_42 = arith.constant 0 : index
    %c256 = arith.constant 256 : index
    %102 = vector.load %arg7[%c0_42, %c256] : memref<8x1024xf32, #tpu.memory_space<vmem>>, vector<8x128xf32>
    tpu.vector_store %arg7[%c0_42, %c256], %101 {strides = array<i32>} : memref<8x1024xf32, #tpu.memory_space<vmem>>, vector<8x128xf32>,
    %c3 = arith.constant 3 : index
    %c0_43 = arith.constant 0 : index
    %c0_44 = arith.constant 0 : index
    %103 = vector.load %arg8[%c3, %c0_43, %c0_44] : memref<8x8x512xf32, #tpu.memory_space<vmem>>, vector<1x8x512xf32>
    %104 = vector.shape_cast %103 : vector<1x8x512xf32> to vector<8x512xf32>
    %c0_45 = arith.constant 0 : index
    %c0_46 = arith.constant 0 : index
    %105 = vector.load %arg6[%c0_45, %c0_46] : memref<128x512xf32, #tpu.memory_space<vmem>>, vector<128x512xf32>
    %cst_47 = arith.constant dense<0.000000e+00> : vector<8x512xf32>
    %106 = tpu.matmul %94, %105, %cst_47 {dimension_numbers = #tpu.dot_dimension_numbers<[1], [0], [0], [1], [0, 0, 1, 1], [], []>} : vector<8x128xf32>, vector<128x512xf32>, vector<8x512xf32> -> vector<8x512xf32>
    %107 = arith.addf %104, %106 : vector<8x512xf32>
    %108 = vector.extract_strided_slice %107 {offsets = [0, 0], sizes = [8, 384], strides = [1, 1]} : vector<8x512xf32> to vector<8x384xf32>
    %109 = arith.negf %108 : vector<8x384xf32>
    %110 = math.exp %109 : vector<8x384xf32>
    %cst_48 = arith.constant 1.000000e+00 : f32
    %111 = vector.broadcast %cst_48 : f32 to vector<8x384xf32>
    %112 = arith.addf %111, %110 : vector<8x384xf32>
    %113 = arith.divf %111, %112 : vector<8x384xf32>
    %114 = vector.extract_strided_slice %113 {offsets = [0, 0], sizes = [8, 128], strides = [1, 1]} : vector<8x384xf32> to vector<8x128xf32>
    %115 = vector.extract_strided_slice %113 {offsets = [0, 128], sizes = [8, 128], strides = [1, 1]} : vector<8x384xf32> to vector<8x128xf32>
    %116 = vector.extract_strided_slice %113 {offsets = [0, 256], sizes = [8, 128], strides = [1, 1]} : vector<8x384xf32> to vector<8x128xf32>
    %117 = vector.extract_strided_slice %107 {offsets = [0, 384], sizes = [8, 128], strides = [1, 1]} : vector<8x512xf32> to vector<8x128xf32>
    %118 = math.tanh %117 : vector<8x128xf32>
    %119 = arith.mulf %115, %92 : vector<8x128xf32>
    %120 = arith.mulf %114, %118 : vector<8x128xf32>
    %121 = arith.addf %119, %120 : vector<8x128xf32>
    %122 = math.tanh %121 : vector<8x128xf32>
    %123 = arith.mulf %116, %122 : vector<8x128xf32>
    %c3_i32 = arith.constant 3 : i32
    %124 = arith.addi %13, %c3_i32 : i32
    %125 = vector.broadcast %124 : i32 to vector<8x1xi32>
    %126 = arith.cmpi slt, %125, %12 : vector<8x1xi32>
    %cst_49 = arith.constant 0.000000e+00 : f32
    %127 = vector.shape_cast %126 : vector<8x1xi1> to vector<8x1xi1>
    %128 = vector.broadcast %127 : vector<8x1xi1> to vector<8x128xi1>
    %129 = vector.broadcast %cst_49 : f32 to vector<8x128xf32>
    %130 = arith.select %128, %123, %129 : vector<8x128xi1>, vector<8x128xf32>
    %c0_50 = arith.constant 0 : index
    %c384 = arith.constant 384 : index
    %131 = vector.load %arg7[%c0_50, %c384] : memref<8x1024xf32, #tpu.memory_space<vmem>>, vector<8x128xf32>
    tpu.vector_store %arg7[%c0_50, %c384], %130 {strides = array<i32>} : memref<8x1024xf32, #tpu.memory_space<vmem>>, vector<8x128xf32>,
    %c4 = arith.constant 4 : index
    %c0_51 = arith.constant 0 : index
    %c0_52 = arith.constant 0 : index
    %132 = vector.load %arg8[%c4, %c0_51, %c0_52] : memref<8x8x512xf32, #tpu.memory_space<vmem>>, vector<1x8x512xf32>
    %133 = vector.shape_cast %132 : vector<1x8x512xf32> to vector<8x512xf32>
    %c0_53 = arith.constant 0 : index
    %c0_54 = arith.constant 0 : index
    %134 = vector.load %arg6[%c0_53, %c0_54] : memref<128x512xf32, #tpu.memory_space<vmem>>, vector<128x512xf32>
    %cst_55 = arith.constant dense<0.000000e+00> : vector<8x512xf32>
    %135 = tpu.matmul %123, %134, %cst_55 {dimension_numbers = #tpu.dot_dimension_numbers<[1], [0], [0], [1], [0, 0, 1, 1], [], []>} : vector<8x128xf32>, vector<128x512xf32>, vector<8x512xf32> -> vector<8x512xf32>
    %136 = arith.addf %133, %135 : vector<8x512xf32>
    %137 = vector.extract_strided_slice %136 {offsets = [0, 0], sizes = [8, 384], strides = [1, 1]} : vector<8x512xf32> to vector<8x384xf32>
    %138 = arith.negf %137 : vector<8x384xf32>
    %139 = math.exp %138 : vector<8x384xf32>
    %cst_56 = arith.constant 1.000000e+00 : f32
    %140 = vector.broadcast %cst_56 : f32 to vector<8x384xf32>
    %141 = arith.addf %140, %139 : vector<8x384xf32>
    %142 = arith.divf %140, %141 : vector<8x384xf32>
    %143 = vector.extract_strided_slice %142 {offsets = [0, 0], sizes = [8, 128], strides = [1, 1]} : vector<8x384xf32> to vector<8x128xf32>
    %144 = vector.extract_strided_slice %142 {offsets = [0, 128], sizes = [8, 128], strides = [1, 1]} : vector<8x384xf32> to vector<8x128xf32>
    %145 = vector.extract_strided_slice %142 {offsets = [0, 256], sizes = [8, 128], strides = [1, 1]} : vector<8x384xf32> to vector<8x128xf32>
    %146 = vector.extract_strided_slice %136 {offsets = [0, 384], sizes = [8, 128], strides = [1, 1]} : vector<8x512xf32> to vector<8x128xf32>
    %147 = math.tanh %146 : vector<8x128xf32>
    %148 = arith.mulf %144, %121 : vector<8x128xf32>
    %149 = arith.mulf %143, %147 : vector<8x128xf32>
    %150 = arith.addf %148, %149 : vector<8x128xf32>
    %151 = math.tanh %150 : vector<8x128xf32>
    %152 = arith.mulf %145, %151 : vector<8x128xf32>
    %c4_i32 = arith.constant 4 : i32
    %153 = arith.addi %13, %c4_i32 : i32
    %154 = vector.broadcast %153 : i32 to vector<8x1xi32>
    %155 = arith.cmpi slt, %154, %12 : vector<8x1xi32>
    %cst_57 = arith.constant 0.000000e+00 : f32
    %156 = vector.shape_cast %155 : vector<8x1xi1> to vector<8x1xi1>
    %157 = vector.broadcast %156 : vector<8x1xi1> to vector<8x128xi1>
    %158 = vector.broadcast %cst_57 : f32 to vector<8x128xf32>
    %159 = arith.select %157, %152, %158 : vector<8x128xi1>, vector<8x128xf32>
    %c0_58 = arith.constant 0 : index
    %c512 = arith.constant 512 : index
    %160 = vector.load %arg7[%c0_58, %c512] : memref<8x1024xf32, #tpu.memory_space<vmem>>, vector<8x128xf32>
    tpu.vector_store %arg7[%c0_58, %c512], %159 {strides = array<i32>} : memref<8x1024xf32, #tpu.memory_space<vmem>>, vector<8x128xf32>,
    %c5 = arith.constant 5 : index
    %c0_59 = arith.constant 0 : index
    %c0_60 = arith.constant 0 : index
    %161 = vector.load %arg8[%c5, %c0_59, %c0_60] : memref<8x8x512xf32, #tpu.memory_space<vmem>>, vector<1x8x512xf32>
    %162 = vector.shape_cast %161 : vector<1x8x512xf32> to vector<8x512xf32>
    %c0_61 = arith.constant 0 : index
    %c0_62 = arith.constant 0 : index
    %163 = vector.load %arg6[%c0_61, %c0_62] : memref<128x512xf32, #tpu.memory_space<vmem>>, vector<128x512xf32>
    %cst_63 = arith.constant dense<0.000000e+00> : vector<8x512xf32>
    %164 = tpu.matmul %152, %163, %cst_63 {dimension_numbers = #tpu.dot_dimension_numbers<[1], [0], [0], [1], [0, 0, 1, 1], [], []>} : vector<8x128xf32>, vector<128x512xf32>, vector<8x512xf32> -> vector<8x512xf32>
    %165 = arith.addf %162, %164 : vector<8x512xf32>
    %166 = vector.extract_strided_slice %165 {offsets = [0, 0], sizes = [8, 384], strides = [1, 1]} : vector<8x512xf32> to vector<8x384xf32>
    %167 = arith.negf %166 : vector<8x384xf32>
    %168 = math.exp %167 : vector<8x384xf32>
    %cst_64 = arith.constant 1.000000e+00 : f32
    %169 = vector.broadcast %cst_64 : f32 to vector<8x384xf32>
    %170 = arith.addf %169, %168 : vector<8x384xf32>
    %171 = arith.divf %169, %170 : vector<8x384xf32>
    %172 = vector.extract_strided_slice %171 {offsets = [0, 0], sizes = [8, 128], strides = [1, 1]} : vector<8x384xf32> to vector<8x128xf32>
    %173 = vector.extract_strided_slice %171 {offsets = [0, 128], sizes = [8, 128], strides = [1, 1]} : vector<8x384xf32> to vector<8x128xf32>
    %174 = vector.extract_strided_slice %171 {offsets = [0, 256], sizes = [8, 128], strides = [1, 1]} : vector<8x384xf32> to vector<8x128xf32>
    %175 = vector.extract_strided_slice %165 {offsets = [0, 384], sizes = [8, 128], strides = [1, 1]} : vector<8x512xf32> to vector<8x128xf32>
    %176 = math.tanh %175 : vector<8x128xf32>
    %177 = arith.mulf %173, %150 : vector<8x128xf32>
    %178 = arith.mulf %172, %176 : vector<8x128xf32>
    %179 = arith.addf %177, %178 : vector<8x128xf32>
    %180 = math.tanh %179 : vector<8x128xf32>
    %181 = arith.mulf %174, %180 : vector<8x128xf32>
    %c5_i32 = arith.constant 5 : i32
    %182 = arith.addi %13, %c5_i32 : i32
    %183 = vector.broadcast %182 : i32 to vector<8x1xi32>
    %184 = arith.cmpi slt, %183, %12 : vector<8x1xi32>
    %cst_65 = arith.constant 0.000000e+00 : f32
    %185 = vector.shape_cast %184 : vector<8x1xi1> to vector<8x1xi1>
    %186 = vector.broadcast %185 : vector<8x1xi1> to vector<8x128xi1>
    %187 = vector.broadcast %cst_65 : f32 to vector<8x128xf32>
    %188 = arith.select %186, %181, %187 : vector<8x128xi1>, vector<8x128xf32>
    %c0_66 = arith.constant 0 : index
    %c640 = arith.constant 640 : index
    %189 = vector.load %arg7[%c0_66, %c640] : memref<8x1024xf32, #tpu.memory_space<vmem>>, vector<8x128xf32>
    tpu.vector_store %arg7[%c0_66, %c640], %188 {strides = array<i32>} : memref<8x1024xf32, #tpu.memory_space<vmem>>, vector<8x128xf32>,
    %c6 = arith.constant 6 : index
    %c0_67 = arith.constant 0 : index
    %c0_68 = arith.constant 0 : index
    %190 = vector.load %arg8[%c6, %c0_67, %c0_68] : memref<8x8x512xf32, #tpu.memory_space<vmem>>, vector<1x8x512xf32>
    %191 = vector.shape_cast %190 : vector<1x8x512xf32> to vector<8x512xf32>
    %c0_69 = arith.constant 0 : index
    %c0_70 = arith.constant 0 : index
    %192 = vector.load %arg6[%c0_69, %c0_70] : memref<128x512xf32, #tpu.memory_space<vmem>>, vector<128x512xf32>
    %cst_71 = arith.constant dense<0.000000e+00> : vector<8x512xf32>
    %193 = tpu.matmul %181, %192, %cst_71 {dimension_numbers = #tpu.dot_dimension_numbers<[1], [0], [0], [1], [0, 0, 1, 1], [], []>} : vector<8x128xf32>, vector<128x512xf32>, vector<8x512xf32> -> vector<8x512xf32>
    %194 = arith.addf %191, %193 : vector<8x512xf32>
    %195 = vector.extract_strided_slice %194 {offsets = [0, 0], sizes = [8, 384], strides = [1, 1]} : vector<8x512xf32> to vector<8x384xf32>
    %196 = arith.negf %195 : vector<8x384xf32>
    %197 = math.exp %196 : vector<8x384xf32>
    %cst_72 = arith.constant 1.000000e+00 : f32
    %198 = vector.broadcast %cst_72 : f32 to vector<8x384xf32>
    %199 = arith.addf %198, %197 : vector<8x384xf32>
    %200 = arith.divf %198, %199 : vector<8x384xf32>
    %201 = vector.extract_strided_slice %200 {offsets = [0, 0], sizes = [8, 128], strides = [1, 1]} : vector<8x384xf32> to vector<8x128xf32>
    %202 = vector.extract_strided_slice %200 {offsets = [0, 128], sizes = [8, 128], strides = [1, 1]} : vector<8x384xf32> to vector<8x128xf32>
    %203 = vector.extract_strided_slice %200 {offsets = [0, 256], sizes = [8, 128], strides = [1, 1]} : vector<8x384xf32> to vector<8x128xf32>
    %204 = vector.extract_strided_slice %194 {offsets = [0, 384], sizes = [8, 128], strides = [1, 1]} : vector<8x512xf32> to vector<8x128xf32>
    %205 = math.tanh %204 : vector<8x128xf32>
    %206 = arith.mulf %202, %179 : vector<8x128xf32>
    %207 = arith.mulf %201, %205 : vector<8x128xf32>
    %208 = arith.addf %206, %207 : vector<8x128xf32>
    %209 = math.tanh %208 : vector<8x128xf32>
    %210 = arith.mulf %203, %209 : vector<8x128xf32>
    %c6_i32 = arith.constant 6 : i32
    %211 = arith.addi %13, %c6_i32 : i32
    %212 = vector.broadcast %211 : i32 to vector<8x1xi32>
    %213 = arith.cmpi slt, %212, %12 : vector<8x1xi32>
    %cst_73 = arith.constant 0.000000e+00 : f32
    %214 = vector.shape_cast %213 : vector<8x1xi1> to vector<8x1xi1>
    %215 = vector.broadcast %214 : vector<8x1xi1> to vector<8x128xi1>
    %216 = vector.broadcast %cst_73 : f32 to vector<8x128xf32>
    %217 = arith.select %215, %210, %216 : vector<8x128xi1>, vector<8x128xf32>
    %c0_74 = arith.constant 0 : index
    %c768 = arith.constant 768 : index
    %218 = vector.load %arg7[%c0_74, %c768] : memref<8x1024xf32, #tpu.memory_space<vmem>>, vector<8x128xf32>
    tpu.vector_store %arg7[%c0_74, %c768], %217 {strides = array<i32>} : memref<8x1024xf32, #tpu.memory_space<vmem>>, vector<8x128xf32>,
    %c7 = arith.constant 7 : index
    %c0_75 = arith.constant 0 : index
    %c0_76 = arith.constant 0 : index
    %219 = vector.load %arg8[%c7, %c0_75, %c0_76] : memref<8x8x512xf32, #tpu.memory_space<vmem>>, vector<1x8x512xf32>
    %220 = vector.shape_cast %219 : vector<1x8x512xf32> to vector<8x512xf32>
    %c0_77 = arith.constant 0 : index
    %c0_78 = arith.constant 0 : index
    %221 = vector.load %arg6[%c0_77, %c0_78] : memref<128x512xf32, #tpu.memory_space<vmem>>, vector<128x512xf32>
    %cst_79 = arith.constant dense<0.000000e+00> : vector<8x512xf32>
    %222 = tpu.matmul %210, %221, %cst_79 {dimension_numbers = #tpu.dot_dimension_numbers<[1], [0], [0], [1], [0, 0, 1, 1], [], []>} : vector<8x128xf32>, vector<128x512xf32>, vector<8x512xf32> -> vector<8x512xf32>
    %223 = arith.addf %220, %222 : vector<8x512xf32>
    %224 = vector.extract_strided_slice %223 {offsets = [0, 0], sizes = [8, 384], strides = [1, 1]} : vector<8x512xf32> to vector<8x384xf32>
    %225 = arith.negf %224 : vector<8x384xf32>
    %226 = math.exp %225 : vector<8x384xf32>
    %cst_80 = arith.constant 1.000000e+00 : f32
    %227 = vector.broadcast %cst_80 : f32 to vector<8x384xf32>
    %228 = arith.addf %227, %226 : vector<8x384xf32>
    %229 = arith.divf %227, %228 : vector<8x384xf32>
    %230 = vector.extract_strided_slice %229 {offsets = [0, 0], sizes = [8, 128], strides = [1, 1]} : vector<8x384xf32> to vector<8x128xf32>
    %231 = vector.extract_strided_slice %229 {offsets = [0, 128], sizes = [8, 128], strides = [1, 1]} : vector<8x384xf32> to vector<8x128xf32>
    %232 = vector.extract_strided_slice %229 {offsets = [0, 256], sizes = [8, 128], strides = [1, 1]} : vector<8x384xf32> to vector<8x128xf32>
    %233 = vector.extract_strided_slice %223 {offsets = [0, 384], sizes = [8, 128], strides = [1, 1]} : vector<8x512xf32> to vector<8x128xf32>
    %234 = math.tanh %233 : vector<8x128xf32>
    %235 = arith.mulf %231, %208 : vector<8x128xf32>
    %236 = arith.mulf %230, %234 : vector<8x128xf32>
    %237 = arith.addf %235, %236 : vector<8x128xf32>
    %238 = math.tanh %237 : vector<8x128xf32>
    %239 = arith.mulf %232, %238 : vector<8x128xf32>
    %c7_i32 = arith.constant 7 : i32
    %240 = arith.addi %13, %c7_i32 : i32
    %241 = vector.broadcast %240 : i32 to vector<8x1xi32>
    %242 = arith.cmpi slt, %241, %12 : vector<8x1xi32>
    %cst_81 = arith.constant 0.000000e+00 : f32
    %243 = vector.shape_cast %242 : vector<8x1xi1> to vector<8x1xi1>
    %244 = vector.broadcast %243 : vector<8x1xi1> to vector<8x128xi1>
    %245 = vector.broadcast %cst_81 : f32 to vector<8x128xf32>
    %246 = arith.select %244, %239, %245 : vector<8x128xi1>, vector<8x128xf32>
    %c0_82 = arith.constant 0 : index
    %c896 = arith.constant 896 : index
    %247 = vector.load %arg7[%c0_82, %c896] : memref<8x1024xf32, #tpu.memory_space<vmem>>, vector<8x128xf32>
    tpu.vector_store %arg7[%c0_82, %c896], %246 {strides = array<i32>} : memref<8x1024xf32, #tpu.memory_space<vmem>>, vector<8x128xf32>,
    %c0_83 = arith.constant 0 : index
    %c0_84 = arith.constant 0 : index
    %248 = vector.load %arg9[%c0_83, %c0_84] : memref<8x128xf32, #tpu.memory_space<vmem>>, vector<8x128xf32>
    tpu.vector_store %arg9[%c0_83, %c0_84], %239 {strides = array<i32>} : memref<8x128xf32, #tpu.memory_space<vmem>>, vector<8x128xf32>,
    %c0_85 = arith.constant 0 : index
    %c0_86 = arith.constant 0 : index
    %249 = vector.load %arg10[%c0_85, %c0_86] : memref<8x128xf32, #tpu.memory_space<vmem>>, vector<8x128xf32>
    tpu.vector_store %arg10[%c0_85, %c0_86], %237 {strides = array<i32>} : memref<8x128xf32, #tpu.memory_space<vmem>>, vector<8x128xf32>,
    return
  }
  func.func @transform_0(%arg0: i32, %arg1: i32) -> (i32, i32) {
    %c0_i32 = arith.constant 0 : i32
    %c0_i32_0 = arith.constant 0 : i32
    return %arg0, %c0_i32 : i32, i32
  }
  func.func @transform_1(%arg0: i32, %arg1: i32) -> (i32, i32, i32) {
    %c0_i32 = arith.constant 0 : i32
    %c0_i32_0 = arith.constant 0 : i32
    return %arg1, %arg0, %c0_i32 : i32, i32, i32
  }
  func.func @transform_2(%arg0: i32, %arg1: i32) -> (i32, i32) {
    %c0_i32 = arith.constant 0 : i32
    %c0_i32_0 = arith.constant 0 : i32
    %c0_i32_1 = arith.constant 0 : i32
    return %c0_i32, %c0_i32_0 : i32, i32
  }
  func.func @transform_3(%arg0: i32, %arg1: i32) -> (i32, i32) {
    %c0_i32 = arith.constant 0 : i32
    %c0_i32_0 = arith.constant 0 : i32
    %c0_i32_1 = arith.constant 0 : i32
    return %c0_i32, %c0_i32_0 : i32, i32
  }
  func.func @transform_4(%arg0: i32, %arg1: i32) -> (i32, i32) {
    %c0_i32 = arith.constant 0 : i32
    %c0_i32_0 = arith.constant 0 : i32
    %c0_i32_1 = arith.constant 0 : i32
    return %c0_i32, %c0_i32_0 : i32, i32
  }
  func.func @transform_5(%arg0: i32, %arg1: i32) -> (i32, i32) {
    %c0_i32 = arith.constant 0 : i32
    return %arg0, %arg1 : i32, i32
  }
}

</mosaic_0001>

<llo_original>
// kernel: seq2seq_encoder_forward.1
$region0: #{seq2seq_encoder_forward.1}
  #allocation0 [shape = 'u32[]', space=smem, size = 0x4, offset = 0x4, fixed_abs, tag = 'smem constant byte address 0x4 - core index']
  #allocation1 [shape = 'u32[72,128]{1,0:T(1,128)}', space=vmem, size = 0x9000, scoped, tag = 'internal scratch']
  #allocation2 [shape = 'f32[8,8,512]{2,1,0:T(8,128)}', space=vmem, size = 0x20000, scoped, tag = 'scratch operand']
  #allocation3 [shape = 'f32[8,128]{1,0:T(8,128)}', space=vmem, size = 0x1000, scoped, tag = 'scratch operand']
  #allocation4 [shape = 'f32[8,128]{1,0:T(8,128)}', space=vmem, size = 0x1000, scoped, tag = 'scratch operand']
  %s0 = inlined_call_operand.vmem [shape: s32[8,1], index: 0, kind: input, shape index: {}]
  %s1 = inlined_call_operand.vmem [shape: f32[8,8,16], index: 1, kind: input, shape index: {}]
  %s2 = inlined_call_operand.vmem [shape: f32[16,512], index: 2, kind: input, shape index: {}]
  %s3 = inlined_call_operand.vmem [shape: f32[1,512], index: 3, kind: input, shape index: {}]
  %s4 = inlined_call_operand.vmem [shape: f32[128,512], index: 4, kind: input, shape index: {}]
  %s5 = inlined_call_operand.vmem [shape: f32[8,1024], index: 5, kind: output, shape index: {}]
  %s6 = sld [smem:[#allocation0]]
  $region34: #{seq2seq_encoder_forward.1} parent=0
    _
  %s8 = ssub.s32 1, %s6
  %s9 = scalar_select 0, %s8, %s6
  // Predicated region
  $region2: #{seq2seq_encoder_forward.1} parent=0 // pred_check
    _
  $region3: #{seq2seq_encoder_forward.1} parent=0 // pred_check_branch
    %11 = sbr.rel (0) target = $region5
  $region4: #{seq2seq_encoder_forward.1} parent=0 // pred_region
    _
  $region5: #{seq2seq_encoder_forward.1} parent=0 // pred_fallthru
    _
  // Predicated region
  $region6: #{seq2seq_encoder_forward.1} parent=0 // pred_check
    _
  $region7: #{seq2seq_encoder_forward.1} parent=0 // pred_check_branch
    %13 = sbr.rel (0) target = $region9
  $region8: #{seq2seq_encoder_forward.1} parent=0 // pred_region
    _
  $region9: #{seq2seq_encoder_forward.1} parent=0 // pred_fallthru
    _
  // Predicated region
  $region10: #{seq2seq_encoder_forward.1} parent=0 // pred_check
    _
  $region11: #{seq2seq_encoder_forward.1} parent=0 // pred_check_branch
    %15 = sbr.rel (0) target = $region13
  $region12: #{seq2seq_encoder_forward.1} parent=0 // pred_region
    _
  $region13: #{seq2seq_encoder_forward.1} parent=0 // pred_fallthru
    _
  // Predicated region
  $region14: #{seq2seq_encoder_forward.1} parent=0 // pred_check
    _
  $region15: #{seq2seq_encoder_forward.1} parent=0 // pred_check_branch
    %17 = sbr.rel (0) target = $region17
  $region16: #{seq2seq_encoder_forward.1} parent=0 // pred_region
    _
  $region17: #{seq2seq_encoder_forward.1} parent=0 // pred_fallthru
    _
  // Predicated region
  $region18: #{seq2seq_encoder_forward.1} parent=0 // pred_check
    _
  $region19: #{seq2seq_encoder_forward.1} parent=0 // pred_check_branch
    %19 = sbr.rel (0) target = $region21
  $region20: #{seq2seq_encoder_forward.1} parent=0 // pred_region
    _
  $region21: #{seq2seq_encoder_forward.1} parent=0 // pred_fallthru
    _
  %p20 = scmp.eq.s32.totalorder 0, 0
  // Predicated region
  $region22: #{seq2seq_encoder_forward.1} parent=0 // pred_check
    %p21 = pneg %p20
  $region23: #{seq2seq_encoder_forward.1} parent=0 // pred_check_branch
    %23 = sbr.rel (%p21) target = $region25
  $region24: #{seq2seq_encoder_forward.1} parent=0 // pred_region
    %24 = vst [vmem:[#allocation3] sm:$0xff] 0.0
    %25 = vst [vmem:[#allocation4] sm:$0xff] 0.0
  $region25: #{seq2seq_encoder_forward.1} parent=0 // pred_fallthru
    _
  %v26 = vld [vmem:[%s1] sm:$0xff]
  %v27 = vld [vmem:[%s1 + $0x8] sm:$0xff]
  %v28 = vld [vmem:[%s1 + $0x10] sm:$0xff]
  %v29 = vld [vmem:[%s1 + $0x18] sm:$0xff]
  %v30 = vld [vmem:[%s1 + $0x20] sm:$0xff]
  %v31 = vld [vmem:[%s1 + $0x28] sm:$0xff]
  %v32 = vld [vmem:[%s1 + $0x30] sm:$0xff]
  %v33 = vld [vmem:[%s1 + $0x38] sm:$0xff]
  %v34 = vld [vmem:[%s2] sm:$0xff]
  %v35 = vld [vmem:[%s2 + $0x8] sm:$0xff]
  %v36 = vld [vmem:[%s2 + $0x10] sm:$0xff]
  %v37 = vld [vmem:[%s2 + $0x18] sm:$0xff]
  %v38 = vld [vmem:[%s2 + $0x20] sm:$0xff]
  %v39 = vld [vmem:[%s2 + $0x28] sm:$0xff]
  %v40 = vld [vmem:[%s2 + $0x30] sm:$0xff]
  %v41 = vld [vmem:[%s2 + $0x38] sm:$0xff]
  %v42 = vld [vmem:[%s3] sm:$0xf]
  %v44 = vperm.slane %v42, 0
  %v45 = vperm.slane %v42, 1
  %v46 = vperm.slane %v42, 2
  %v47 = vperm.slane %v42, 3
  %vm52 = vcmask 130048
  %v54 = vsel %vm52, %v26, 0
  %v57 = vsel %vm52, %v27, 0
  %v60 = vsel %vm52, %v28, 0
  %v63 = vsel %vm52, %v29, 0
  %v66 = vsel %vm52, %v30, 0
  %v69 = vsel %vm52, %v31, 0
  %v72 = vsel %vm52, %v32, 0
  %v75 = vsel %vm52, %v33, 0
  %77 = vmatpush.msra.mxu0 0.0
  %78 = vmatpush.msra.mxu0 0.0
  %79 = vmatpush.msra.mxu0 0.0
  %80 = vmatpush.msra.mxu0 0.0
  %81 = vmatpush.msra.mxu0 0.0
  %82 = vmatpush.msra.mxu0 0.0
  %83 = vmatpush.msra.mxu0 0.0
  %84 = vmatpush.msra.mxu0 0.0
  %85 = vmatpush.msra.mxu0 0.0
  %86 = vmatpush.msra.mxu0 0.0
  %87 = vmatpush.msra.mxu0 0.0
  %88 = vmatpush.msra.mxu0 0.0
  %89 = vmatpush.msra.mxu0 0.0
  %90 = vmatpush.msra.mxu0 0.0
  %91 = vmatpush.msra.mxu0 %v38
  %92 = vmatpush.msra.mxu0 %v34
  %93 = vmatmul.f32.gmra.mxu0 %v54
  %v94 = vpop.f32.mrf.mxu0
  %v95 = vadd.f32 %v44, %v94
  %96 = vmatmul.f32.gmra.mxu0 %v57
  %v97 = vpop.f32.mrf.mxu0
  %v98 = vadd.f32 %v44, %v97
  %99 = vmatmul.f32.gmra.mxu0 %v60
  %v100 = vpop.f32.mrf.mxu0
  %v101 = vadd.f32 %v44, %v100
  %102 = vmatmul.f32.gmra.mxu0 %v63
  %v103 = vpop.f32.mrf.mxu0
  %v104 = vadd.f32 %v44, %v103
  %105 = vmatmul.f32.gmra.mxu0 %v66
  %v106 = vpop.f32.mrf.mxu0
  %v107 = vadd.f32 %v44, %v106
  %108 = vmatmul.f32.gmra.mxu0 %v69
  %v109 = vpop.f32.mrf.mxu0
  %v110 = vadd.f32 %v44, %v109
  %111 = vmatmul.f32.gmra.mxu0 %v72
  %v112 = vpop.f32.mrf.mxu0
  %v113 = vadd.f32 %v44, %v112
  %114 = vmatmul.f32.gmra.mxu0 %v75
  %v115 = vpop.f32.mrf.mxu0
  %v116 = vadd.f32 %v44, %v115
  %117 = vdwg.mxu0
  %118 = vmatpush.msra.mxu0 0.0
  %119 = vmatpush.msra.mxu0 0.0
  %120 = vmatpush.msra.mxu0 0.0
  %121 = vmatpush.msra.mxu0 0.0
  %122 = vmatpush.msra.mxu0 0.0
  %123 = vmatpush.msra.mxu0 0.0
  %124 = vmatpush.msra.mxu0 0.0
  %125 = vmatpush.msra.mxu0 0.0
  %126 = vmatpush.msra.mxu0 0.0
  %127 = vmatpush.msra.mxu0 0.0
  %128 = vmatpush.msra.mxu0 0.0
  %129 = vmatpush.msra.mxu0 0.0
  %130 = vmatpush.msra.mxu0 0.0
  %131 = vmatpush.msra.mxu0 0.0
  %132 = vmatpush.msra.mxu0 %v39
  %133 = vmatpush.msra.mxu0 %v35
  %134 = vmatmul.f32.gmra.mxu0 %v54
  %v135 = vpop.f32.mrf.mxu0
  %v136 = vadd.f32 %v45, %v135
  %137 = vmatmul.f32.gmra.mxu0 %v57
  %v138 = vpop.f32.mrf.mxu0
  %v139 = vadd.f32 %v45, %v138
  %140 = vmatmul.f32.gmra.mxu0 %v60
  %v141 = vpop.f32.mrf.mxu0
  %v142 = vadd.f32 %v45, %v141
  %143 = vmatmul.f32.gmra.mxu0 %v63
  %v144 = vpop.f32.mrf.mxu0
  %v145 = vadd.f32 %v45, %v144
  %146 = vmatmul.f32.gmra.mxu0 %v66
  %v147 = vpop.f32.mrf.mxu0
  %v148 = vadd.f32 %v45, %v147
  %149 = vmatmul.f32.gmra.mxu0 %v69
  %v150 = vpop.f32.mrf.mxu0
  %v151 = vadd.f32 %v45, %v150
  %152 = vmatmul.f32.gmra.mxu0 %v72
  %v153 = vpop.f32.mrf.mxu0
  %v154 = vadd.f32 %v45, %v153
  %155 = vmatmul.f32.gmra.mxu0 %v75
  %v156 = vpop.f32.mrf.mxu0
  %v157 = vadd.f32 %v45, %v156
  %158 = vdwg.mxu0
  %159 = vmatpush.msra.mxu0 0.0
  %160 = vmatpush.msra.mxu0 0.0
  %161 = vmatpush.msra.mxu0 0.0
  %162 = vmatpush.msra.mxu0 0.0
  %163 = vmatpush.msra.mxu0 0.0
  %164 = vmatpush.msra.mxu0 0.0
  %165 = vmatpush.msra.mxu0 0.0
  %166 = vmatpush.msra.mxu0 0.0
  %167 = vmatpush.msra.mxu0 0.0
  %168 = vmatpush.msra.mxu0 0.0
  %169 = vmatpush.msra.mxu0 0.0
  %170 = vmatpush.msra.mxu0 0.0
  %171 = vmatpush.msra.mxu0 0.0
  %172 = vmatpush.msra.mxu0 0.0
  %173 = vmatpush.msra.mxu0 %v40
  %174 = vmatpush.msra.mxu0 %v36
  %175 = vmatmul.f32.gmra.mxu0 %v54
  %v176 = vpop.f32.mrf.mxu0
  %v177 = vadd.f32 %v46, %v176
  %178 = vmatmul.f32.gmra.mxu0 %v57
  %v179 = vpop.f32.mrf.mxu0
  %v180 = vadd.f32 %v46, %v179
  %181 = vmatmul.f32.gmra.mxu0 %v60
  %v182 = vpop.f32.mrf.mxu0
  %v183 = vadd.f32 %v46, %v182
  %184 = vmatmul.f32.gmra.mxu0 %v63
  %v185 = vpop.f32.mrf.mxu0
  %v186 = vadd.f32 %v46, %v185
  %187 = vmatmul.f32.gmra.mxu0 %v66
  %v188 = vpop.f32.mrf.mxu0
  %v189 = vadd.f32 %v46, %v188
  %190 = vmatmul.f32.gmra.mxu0 %v69
  %v191 = vpop.f32.mrf.mxu0
  %v192 = vadd.f32 %v46, %v191
  %193 = vmatmul.f32.gmra.mxu0 %v72
  %v194 = vpop.f32.mrf.mxu0
  %v195 = vadd.f32 %v46, %v194
  %196 = vmatmul.f32.gmra.mxu0 %v75
  %v197 = vpop.f32.mrf.mxu0
  %v198 = vadd.f32 %v46, %v197
  %199 = vdwg.mxu0
  %200 = vmatpush.msra.mxu0 0.0
  %201 = vmatpush.msra.mxu0 0.0
  %202 = vmatpush.msra.mxu0 0.0
  %203 = vmatpush.msra.mxu0 0.0
  %204 = vmatpush.msra.mxu0 0.0
  %205 = vmatpush.msra.mxu0 0.0
  %206 = vmatpush.msra.mxu0 0.0
  %207 = vmatpush.msra.mxu0 0.0
  %208 = vmatpush.msra.mxu0 0.0
  %209 = vmatpush.msra.mxu0 0.0
  %210 = vmatpush.msra.mxu0 0.0
  %211 = vmatpush.msra.mxu0 0.0
  %212 = vmatpush.msra.mxu0 0.0
  %213 = vmatpush.msra.mxu0 0.0
  %214 = vmatpush.msra.mxu0 %v41
  %215 = vmatpush.msra.mxu0 %v37
  %216 = vmatmul.f32.gmra.mxu0 %v54
  %v217 = vpop.f32.mrf.mxu0
  %v218 = vadd.f32 %v47, %v217
  %219 = vmatmul.f32.gmra.mxu0 %v57
  %v220 = vpop.f32.mrf.mxu0
  %v221 = vadd.f32 %v47, %v220
  %222 = vmatmul.f32.gmra.mxu0 %v60
  %v223 = vpop.f32.mrf.mxu0
  %v224 = vadd.f32 %v47, %v223
  %225 = vmatmul.f32.gmra.mxu0 %v63
  %v226 = vpop.f32.mrf.mxu0
  %v227 = vadd.f32 %v47, %v226
  %228 = vmatmul.f32.gmra.mxu0 %v66
  %v229 = vpop.f32.mrf.mxu0
  %v230 = vadd.f32 %v47, %v229
  %231 = vmatmul.f32.gmra.mxu0 %v69
  %v232 = vpop.f32.mrf.mxu0
  %v233 = vadd.f32 %v47, %v232
  %234 = vmatmul.f32.gmra.mxu0 %v72
  %v235 = vpop.f32.mrf.mxu0
  %v236 = vadd.f32 %v47, %v235
  %237 = vmatmul.f32.gmra.mxu0 %v75
  %v238 = vpop.f32.mrf.mxu0
  %v239 = vadd.f32 %v47, %v238
  %240 = vdwg.mxu0
  %241 = vst [vmem:[#allocation2] sm:$0xff] %v95
  %242 = vst [vmem:[#allocation2 + $0x8] sm:$0xff] %v136
  %243 = vst [vmem:[#allocation2 + $0x10] sm:$0xff] %v177
  %244 = vst [vmem:[#allocation2 + $0x18] sm:$0xff] %v218
  %245 = vst [vmem:[#allocation2 + $0x20] sm:$0xff] %v98
  %246 = vst [vmem:[#allocation2 + $0x28] sm:$0xff] %v139
  %247 = vst [vmem:[#allocation2 + $0x30] sm:$0xff] %v180
  %248 = vst [vmem:[#allocation2 + $0x38] sm:$0xff] %v221
  %249 = vst [vmem:[#allocation2 + $0x40] sm:$0xff] %v101
  %250 = vst [vmem:[#allocation2 + $0x48] sm:$0xff] %v142
  %251 = vst [vmem:[#allocation2 + $0x50] sm:$0xff] %v183
  %252 = vst [vmem:[#allocation2 + $0x58] sm:$0xff] %v224
  %253 = vst [vmem:[#allocation2 + $0x60] sm:$0xff] %v104
  %254 = vst [vmem:[#allocation2 + $0x68] sm:$0xff] %v145
  %255 = vst [vmem:[#allocation2 + $0x70] sm:$0xff] %v186
  %256 = vst [vmem:[#allocation2 + $0x78] sm:$0xff] %v227
  %257 = vst [vmem:[#allocation2 + $0x80] sm:$0xff] %v107
  %258 = vst [vmem:[#allocation2 + $0x88] sm:$0xff] %v148
  %259 = vst [vmem:[#allocation2 + $0x90] sm:$0xff] %v189
  %260 = vst [vmem:[#allocation2 + $0x98] sm:$0xff] %v230
  %261 = vst [vmem:[#allocation2 + $0xa0] sm:$0xff] %v110
  %262 = vst [vmem:[#allocation2 + $0xa8] sm:$0xff] %v151
  %263 = vst [vmem:[#allocation2 + $0xb0] sm:$0xff] %v192
  %264 = vst [vmem:[#allocation2 + $0xb8] sm:$0xff] %v233
  %265 = vst [vmem:[#allocation2 + $0xc0] sm:$0xff] %v113
  %266 = vst [vmem:[#allocation2 + $0xc8] sm:$0xff] %v154
  %267 = vst [vmem:[#allocation2 + $0xd0] sm:$0xff] %v195
  %268 = vst [vmem:[#allocation2 + $0xd8] sm:$0xff] %v236
  %269 = vst [vmem:[#allocation2 + $0xe0] sm:$0xff] %v116
  %270 = vst [vmem:[#allocation2 + $0xe8] sm:$0xff] %v157
  %271 = vst [vmem:[#allocation2 + $0xf0] sm:$0xff] %v198
  %272 = vst [vmem:[#allocation2 + $0xf8] sm:$0xff] %v239
  %v273 = vld [vmem:[%s0] sm:$0xff]
  %s274 = smul.u32 0, 8
  %v275 = vld [vmem:[#allocation3] sm:$0xff]
  %v276 = vld [vmem:[#allocation4] sm:$0xff]
  %v277 = vld [vmem:[#allocation2] sm:$0xff]
  %v278 = vld [vmem:[#allocation2 + $0x8] sm:$0xff]
  %v279 = vld [vmem:[#allocation2 + $0x10] sm:$0xff]
  %v280 = vld [vmem:[#allocation2 + $0x18] sm:$0xff]
  %v281 = vld [vmem:[%s4] sm:$0xff]
  %v282 = vld [vmem:[%s4 + $0x8] sm:$0xff]
  %v283 = vld [vmem:[%s4 + $0x10] sm:$0xff]
  %v284 = vld [vmem:[%s4 + $0x18] sm:$0xff]
  %v285 = vld [vmem:[%s4 + $0x20] sm:$0xff]
  %v286 = vld [vmem:[%s4 + $0x28] sm:$0xff]
  %v287 = vld [vmem:[%s4 + $0x30] sm:$0xff]
  %v288 = vld [vmem:[%s4 + $0x38] sm:$0xff]
  %v289 = vld [vmem:[%s4 + $0x40] sm:$0xff]
  %v290 = vld [vmem:[%s4 + $0x48] sm:$0xff]
  %v291 = vld [vmem:[%s4 + $0x50] sm:$0xff]
  %v292 = vld [vmem:[%s4 + $0x58] sm:$0xff]
  %v293 = vld [vmem:[%s4 + $0x60] sm:$0xff]
  %v294 = vld [vmem:[%s4 + $0x68] sm:$0xff]
  %v295 = vld [vmem:[%s4 + $0x70] sm:$0xff]
  %v296 = vld [vmem:[%s4 + $0x78] sm:$0xff]
  %v297 = vld [vmem:[%s4 + $0x80] sm:$0xff]
  %v298 = vld [vmem:[%s4 + $0x88] sm:$0xff]
  %v299 = vld [vmem:[%s4 + $0x90] sm:$0xff]
  %v300 = vld [vmem:[%s4 + $0x98] sm:$0xff]
  %v301 = vld [vmem:[%s4 + $0xa0] sm:$0xff]
  %v302 = vld [vmem:[%s4 + $0xa8] sm:$0xff]
  %v303 = vld [vmem:[%s4 + $0xb0] sm:$0xff]
  %v304 = vld [vmem:[%s4 + $0xb8] sm:$0xff]
  %v305 = vld [vmem:[%s4 + $0xc0] sm:$0xff]
  %v306 = vld [vmem:[%s4 + $0xc8] sm:$0xff]
  %v307 = vld [vmem:[%s4 + $0xd0] sm:$0xff]
  %v308 = vld [vmem:[%s4 + $0xd8] sm:$0xff]
  %v309 = vld [vmem:[%s4 + $0xe0] sm:$0xff]
  %v310 = vld [vmem:[%s4 + $0xe8] sm:$0xff]
  %v311 = vld [vmem:[%s4 + $0xf0] sm:$0xff]
  %v312 = vld [vmem:[%s4 + $0xf8] sm:$0xff]
  %v313 = vld [vmem:[%s4 + $0x100] sm:$0xff]
  %v314 = vld [vmem:[%s4 + $0x108] sm:$0xff]
  %v315 = vld [vmem:[%s4 + $0x110] sm:$0xff]
  %v316 = vld [vmem:[%s4 + $0x118] sm:$0xff]
  %v317 = vld [vmem:[%s4 + $0x120] sm:$0xff]
  %v318 = vld [vmem:[%s4 + $0x128] sm:$0xff]
  %v319 = vld [vmem:[%s4 + $0x130] sm:$0xff]
  %v320 = vld [vmem:[%s4 + $0x138] sm:$0xff]
  %v321 = vld [vmem:[%s4 + $0x140] sm:$0xff]
  %v322 = vld [vmem:[%s4 + $0x148] sm:$0xff]
  %v323 = vld [vmem:[%s4 + $0x150] sm:$0xff]
  %v324 = vld [vmem:[%s4 + $0x158] sm:$0xff]
  %v325 = vld [vmem:[%s4 + $0x160] sm:$0xff]
  %v326 = vld [vmem:[%s4 + $0x168] sm:$0xff]
  %v327 = vld [vmem:[%s4 + $0x170] sm:$0xff]
  %v328 = vld [vmem:[%s4 + $0x178] sm:$0xff]
  %v329 = vld [vmem:[%s4 + $0x180] sm:$0xff]
  %v330 = vld [vmem:[%s4 + $0x188] sm:$0xff]
  %v331 = vld [vmem:[%s4 + $0x190] sm:$0xff]
  %v332 = vld [vmem:[%s4 + $0x198] sm:$0xff]
  %v333 = vld [vmem:[%s4 + $0x1a0] sm:$0xff]
  %v334 = vld [vmem:[%s4 + $0x1a8] sm:$0xff]
  %v335 = vld [vmem:[%s4 + $0x1b0] sm:$0xff]
  %v336 = vld [vmem:[%s4 + $0x1b8] sm:$0xff]
  %v337 = vld [vmem:[%s4 + $0x1c0] sm:$0xff]
  %v338 = vld [vmem:[%s4 + $0x1c8] sm:$0xff]
  %v339 = vld [vmem:[%s4 + $0x1d0] sm:$0xff]
  %v340 = vld [vmem:[%s4 + $0x1d8] sm:$0xff]
  %v341 = vld [vmem:[%s4 + $0x1e0] sm:$0xff]
  %v342 = vld [vmem:[%s4 + $0x1e8] sm:$0xff]
  %v343 = vld [vmem:[%s4 + $0x1f0] sm:$0xff]
  %v344 = vld [vmem:[%s4 + $0x1f8] sm:$0xff]
  %345 = vmatpush.msra.mxu0 %v341
  %346 = vmatpush.msra.mxu0 %v337
  %347 = vmatpush.msra.mxu0 %v333
  %348 = vmatpush.msra.mxu0 %v329
  %349 = vmatpush.msra.mxu0 %v325
  %350 = vmatpush.msra.mxu0 %v321
  %351 = vmatpush.msra.mxu0 %v317
  %352 = vmatpush.msra.mxu0 %v313
  %353 = vmatpush.msra.mxu0 %v309
  %354 = vmatpush.msra.mxu0 %v305
  %355 = vmatpush.msra.mxu0 %v301
  %356 = vmatpush.msra.mxu0 %v297
  %357 = vmatpush.msra.mxu0 %v293
  %358 = vmatpush.msra.mxu0 %v289
  %359 = vmatpush.msra.mxu0 %v285
  %360 = vmatpush.msra.mxu0 %v281
  %361 = vmatmul.f32.gmra.mxu0 %v275
  %v362 = vpop.f32.mrf.mxu0
  %v363 = vadd.f32 0.0, %v362
  %364 = vdwg.mxu0
  %365 = vmatpush.msra.mxu0 %v342
  %366 = vmatpush.msra.mxu0 %v338
  %367 = vmatpush.msra.mxu0 %v334
  %368 = vmatpush.msra.mxu0 %v330
  %369 = vmatpush.msra.mxu0 %v326
  %370 = vmatpush.msra.mxu0 %v322
  %371 = vmatpush.msra.mxu0 %v318
  %372 = vmatpush.msra.mxu0 %v314
  %373 = vmatpush.msra.mxu0 %v310
  %374 = vmatpush.msra.mxu0 %v306
  %375 = vmatpush.msra.mxu0 %v302
  %376 = vmatpush.msra.mxu0 %v298
  %377 = vmatpush.msra.mxu0 %v294
  %378 = vmatpush.msra.mxu0 %v290
  %379 = vmatpush.msra.mxu0 %v286
  %380 = vmatpush.msra.mxu0 %v282
  %381 = vmatmul.f32.gmra.mxu0 %v275
  %v382 = vpop.f32.mrf.mxu0
  %v383 = vadd.f32 0.0, %v382
  %384 = vdwg.mxu0
  %385 = vmatpush.msra.mxu0 %v343
  %386 = vmatpush.msra.mxu0 %v339
  %387 = vmatpush.msra.mxu0 %v335
  %388 = vmatpush.msra.mxu0 %v331
  %389 = vmatpush.msra.mxu0 %v327
  %390 = vmatpush.msra.mxu0 %v323
  %391 = vmatpush.msra.mxu0 %v319
  %392 = vmatpush.msra.mxu0 %v315
  %393 = vmatpush.msra.mxu0 %v311
  %394 = vmatpush.msra.mxu0 %v307
  %395 = vmatpush.msra.mxu0 %v303
  %396 = vmatpush.msra.mxu0 %v299
  %397 = vmatpush.msra.mxu0 %v295
  %398 = vmatpush.msra.mxu0 %v291
  %399 = vmatpush.msra.mxu0 %v287
  %400 = vmatpush.msra.mxu0 %v283
  %401 = vmatmul.f32.gmra.mxu0 %v275
  %v402 = vpop.f32.mrf.mxu0
  %v403 = vadd.f32 0.0, %v402
  %404 = vdwg.mxu0
  %405 = vmatpush.msra.mxu0 %v344
  %406 = vmatpush.msra.mxu0 %v340
  %407 = vmatpush.msra.mxu0 %v336
  %408 = vmatpush.msra.mxu0 %v332
  %409 = vmatpush.msra.mxu0 %v328
  %410 = vmatpush.msra.mxu0 %v324
  %411 = vmatpush.msra.mxu0 %v320
  %412 = vmatpush.msra.mxu0 %v316
  %413 = vmatpush.msra.mxu0 %v312
  %414 = vmatpush.msra.mxu0 %v308
  %415 = vmatpush.msra.mxu0 %v304
  %416 = vmatpush.msra.mxu0 %v300
  %417 = vmatpush.msra.mxu0 %v296
  %418 = vmatpush.msra.mxu0 %v292
  %419 = vmatpush.msra.mxu0 %v288
  %420 = vmatpush.msra.mxu0 %v284
  %421 = vmatmul.f32.gmra.mxu0 %v275
  %v422 = vpop.f32.mrf.mxu0
  %v423 = vadd.f32 0.0, %v422
  %424 = vdwg.mxu0
  %v425 = vadd.f32 %v277, %v363
  %v426 = vadd.f32 %v278, %v383
  %v427 = vadd.f32 %v279, %v403
  %v428 = vadd.f32 %v280, %v423
  %v429 = vxor.u32 %v425, 2147483648
  %v430 = vxor.u32 %v426, 2147483648
  %v431 = vxor.u32 %v427, 2147483648
  %v432 = vmul.f32 %v429, 1.442695
  %v433 = vpow.pop %v432
  %v434 = vmul.f32 %v430, 1.442695
  %v435 = vpow.pop %v434
  %v436 = vmul.f32 %v431, 1.442695
  %v437 = vpow.pop %v436
  %v438 = vadd.f32 %v433, 1.0
  %v439 = vadd.f32 %v435, 1.0
  %v440 = vadd.f32 %v437, 1.0
  %v441 = vrcp.pop %v438
  %v442 = vmul.f32 %v438, %v441
  %v443 = vsub.f32 1.0, %v442
  %v444 = vmul.f32 %v441, %v443
  %v445 = vadd.f32 %v441, %v444
  %vm446 = vweird.f32 %v438
  %vm447 = vweird.f32 %v441
  %vm448 = vmor %vm446, %vm447
  %v449 = vsel %vm448, %v441, %v445
  %v450 = vand.u32 2147483647, %v438
  %vm451 = vcmp.eq.f32.partialorder %v450, 8.507059e+37
  %v452 = vand.u32 %v438, 2147483648
  %v453 = vor.u32 1.1754944e-38, %v452
  %v454 = vsel %vm451, %v453, %v449
  %v455 = vmul.f32 1.0, %v454
  %v456 = vrcp.pop %v439
  %v457 = vmul.f32 %v439, %v456
  %v458 = vsub.f32 1.0, %v457
  %v459 = vmul.f32 %v456, %v458
  %v460 = vadd.f32 %v456, %v459
  %vm461 = vweird.f32 %v439
  %vm462 = vweird.f32 %v456
  %vm463 = vmor %vm461, %vm462
  %v464 = vsel %vm463, %v456, %v460
  %v465 = vand.u32 2147483647, %v439
  %vm466 = vcmp.eq.f32.partialorder %v465, 8.507059e+37
  %v467 = vand.u32 %v439, 2147483648
  %v468 = vor.u32 1.1754944e-38, %v467
  %v469 = vsel %vm466, %v468, %v464
  %v470 = vmul.f32 1.0, %v469
  %v471 = vrcp.pop %v440
  %v472 = vmul.f32 %v440, %v471
  %v473 = vsub.f32 1.0, %v472
  %v474 = vmul.f32 %v471, %v473
  %v475 = vadd.f32 %v471, %v474
  %vm476 = vweird.f32 %v440
  %vm477 = vweird.f32 %v471
  %vm478 = vmor %vm476, %vm477
  %v479 = vsel %vm478, %v471, %v475
  %v480 = vand.u32 2147483647, %v440
  %vm481 = vcmp.eq.f32.partialorder %v480, 8.507059e+37
  %v482 = vand.u32 %v440, 2147483648
  %v483 = vor.u32 1.1754944e-38, %v482
  %v484 = vsel %vm481, %v483, %v479
  %v485 = vmul.f32 1.0, %v484
  %v486 = vtanh.pop %v428
  %v487 = vmul.f32 %v470, %v276
  %v488 = vmul.f32 %v455, %v486
  %v489 = vadd.f32 %v487, %v488
  %v490 = vtanh.pop %v489
  %v491 = vmul.f32 %v485, %v490
  %v492 = vstv %s274
  %vm493 = vcmp.lt.s32.totalorder %v492, %v273
  %v494 = vsel %vm493, 1, 0
  %495 = vset.pattern.permute.xlu0 0
  %496 = vperm.xlu0 %495, %v494
  %v497 = vpop.permute.xlu0 %496
  %vm498 = vcmp.eq.s32.totalorder %v497, 1
  %v499 = vsel %vm498, %v491, 0.0
  %500 = vst [vmem:[%s5] sm:$0xff] %v499
  %s501 = scalar_lea.vmem [#allocation2], 32
  %v502 = vld [vmem:[%s501] sm:$0xff]
  %v503 = vld [vmem:[%s501 + $0x8] sm:$0xff]
  %v504 = vld [vmem:[%s501 + $0x10] sm:$0xff]
  %v505 = vld [vmem:[%s501 + $0x18] sm:$0xff]
  %v506 = vld [vmem:[%s4] sm:$0xff]
  %v507 = vld [vmem:[%s4 + $0x8] sm:$0xff]
  %v508 = vld [vmem:[%s4 + $0x10] sm:$0xff]
  %v509 = vld [vmem:[%s4 + $0x18] sm:$0xff]
  %v510 = vld [vmem:[%s4 + $0x20] sm:$0xff]
  %v511 = vld [vmem:[%s4 + $0x28] sm:$0xff]
  %v512 = vld [vmem:[%s4 + $0x30] sm:$0xff]
  %v513 = vld [vmem:[%s4 + $0x38] sm:$0xff]
  %v514 = vld [vmem:[%s4 + $0x40] sm:$0xff]
  %v515 = vld [vmem:[%s4 + $0x48] sm:$0xff]
  %v516 = vld [vmem:[%s4 + $0x50] sm:$0xff]
  %v517 = vld [vmem:[%s4 + $0x58] sm:$0xff]
  %v518 = vld [vmem:[%s4 + $0x60] sm:$0xff]
  %v519 = vld [vmem:[%s4 + $0x68] sm:$0xff]
  %v520 = vld [vmem:[%s4 + $0x70] sm:$0xff]
  %v521 = vld [vmem:[%s4 + $0x78] sm:$0xff]
  %v522 = vld [vmem:[%s4 + $0x80] sm:$0xff]
  %v523 = vld [vmem:[%s4 + $0x88] sm:$0xff]
  %v524 = vld [vmem:[%s4 + $0x90] sm:$0xff]
  %v525 = vld [vmem:[%s4 + $0x98] sm:$0xff]
  %v526 = vld [vmem:[%s4 + $0xa0] sm:$0xff]
  %v527 = vld [vmem:[%s4 + $0xa8] sm:$0xff]
  %v528 = vld [vmem:[%s4 + $0xb0] sm:$0xff]
  %v529 = vld [vmem:[%s4 + $0xb8] sm:$0xff]
  %v530 = vld [vmem:[%s4 + $0xc0] sm:$0xff]
  %v531 = vld [vmem:[%s4 + $0xc8] sm:$0xff]
  %v532 = vld [vmem:[%s4 + $0xd0] sm:$0xff]
  %v533 = vld [vmem:[%s4 + $0xd8] sm:$0xff]
  %v534 = vld [vmem:[%s4 + $0xe0] sm:$0xff]
  %v535 = vld [vmem:[%s4 + $0xe8] sm:$0xff]
  %v536 = vld [vmem:[%s4 + $0xf0] sm:$0xff]
  %v537 = vld [vmem:[%s4 + $0xf8] sm:$0xff]
  %v538 = vld [vmem:[%s4 + $0x100] sm:$0xff]
  %v539 = vld [vmem:[%s4 + $0x108] sm:$0xff]
  %v540 = vld [vmem:[%s4 + $0x110] sm:$0xff]
  %v541 = vld [vmem:[%s4 + $0x118] sm:$0xff]
  %v542 = vld [vmem:[%s4 + $0x120] sm:$0xff]
  %v543 = vld [vmem:[%s4 + $0x128] sm:$0xff]
  %v544 = vld [vmem:[%s4 + $0x130] sm:$0xff]
  %v545 = vld [vmem:[%s4 + $0x138] sm:$0xff]
  %v546 = vld [vmem:[%s4 + $0x140] sm:$0xff]
  %v547 = vld [vmem:[%s4 + $0x148] sm:$0xff]
  %v548 = vld [vmem:[%s4 + $0x150] sm:$0xff]
  %v549 = vld [vmem:[%s4 + $0x158] sm:$0xff]
  %v550 = vld [vmem:[%s4 + $0x160] sm:$0xff]
  %v551 = vld [vmem:[%s4 + $0x168] sm:$0xff]
  %v552 = vld [vmem:[%s4 + $0x170] sm:$0xff]
  %v553 = vld [vmem:[%s4 + $0x178] sm:$0xff]
  %v554 = vld [vmem:[%s4 + $0x180] sm:$0xff]
  %v555 = vld [vmem:[%s4 + $0x188] sm:$0xff]
  %v556 = vld [vmem:[%s4 + $0x190] sm:$0xff]
  %v557 = vld [vmem:[%s4 + $0x198] sm:$0xff]
  %v558 = vld [vmem:[%s4 + $0x1a0] sm:$0xff]
  %v559 = vld [vmem:[%s4 + $0x1a8] sm:$0xff]
  %v560 = vld [vmem:[%s4 + $0x1b0] sm:$0xff]
  %v561 = vld [vmem:[%s4 + $0x1b8] sm:$0xff]
  %v562 = vld [vmem:[%s4 + $0x1c0] sm:$0xff]
  %v563 = vld [vmem:[%s4 + $0x1c8] sm:$0xff]
  %v564 = vld [vmem:[%s4 + $0x1d0] sm:$0xff]
  %v565 = vld [vmem:[%s4 + $0x1d8] sm:$0xff]
  %v566 = vld [vmem:[%s4 + $0x1e0] sm:$0xff]
  %v567 = vld [vmem:[%s4 + $0x1e8] sm:$0xff]
  %v568 = vld [vmem:[%s4 + $0x1f0] sm:$0xff]
  %v569 = vld [vmem:[%s4 + $0x1f8] sm:$0xff]
  %570 = vmatpush.msra.mxu0 %v566
  %571 = vmatpush.msra.mxu0 %v562
  %572 = vmatpush.msra.mxu0 %v558
  %573 = vmatpush.msra.mxu0 %v554
  %574 = vmatpush.msra.mxu0 %v550
  %575 = vmatpush.msra.mxu0 %v546
  %576 = vmatpush.msra.mxu0 %v542
  %577 = vmatpush.msra.mxu0 %v538
  %578 = vmatpush.msra.mxu0 %v534
  %579 = vmatpush.msra.mxu0 %v530
  %580 = vmatpush.msra.mxu0 %v526
  %581 = vmatpush.msra.mxu0 %v522
  %582 = vmatpush.msra.mxu0 %v518
  %583 = vmatpush.msra.mxu0 %v514
  %584 = vmatpush.msra.mxu0 %v510
  %585 = vmatpush.msra.mxu0 %v506
  %586 = vmatmul.f32.gmra.mxu0 %v491
  %v587 = vpop.f32.mrf.mxu0
  %v588 = vadd.f32 0.0, %v587
  %589 = vdwg.mxu0
  %590 = vmatpush.msra.mxu0 %v567
  %591 = vmatpush.msra.mxu0 %v563
  %592 = vmatpush.msra.mxu0 %v559
  %593 = vmatpush.msra.mxu0 %v555
  %594 = vmatpush.msra.mxu0 %v551
  %595 = vmatpush.msra.mxu0 %v547
  %596 = vmatpush.msra.mxu0 %v543
  %597 = vmatpush.msra.mxu0 %v539
  %598 = vmatpush.msra.mxu0 %v535
  %599 = vmatpush.msra.mxu0 %v531
  %600 = vmatpush.msra.mxu0 %v527
  %601 = vmatpush.msra.mxu0 %v523
  %602 = vmatpush.msra.mxu0 %v519
  %603 = vmatpush.msra.mxu0 %v515
  %604 = vmatpush.msra.mxu0 %v511
  %605 = vmatpush.msra.mxu0 %v507
  %606 = vmatmul.f32.gmra.mxu0 %v491
  %v607 = vpop.f32.mrf.mxu0
  %v608 = vadd.f32 0.0, %v607
  %609 = vdwg.mxu0
  %610 = vmatpush.msra.mxu0 %v568
  %611 = vmatpush.msra.mxu0 %v564
  %612 = vmatpush.msra.mxu0 %v560
  %613 = vmatpush.msra.mxu0 %v556
  %614 = vmatpush.msra.mxu0 %v552
  %615 = vmatpush.msra.mxu0 %v548
  %616 = vmatpush.msra.mxu0 %v544
  %617 = vmatpush.msra.mxu0 %v540
  %618 = vmatpush.msra.mxu0 %v536
  %619 = vmatpush.msra.mxu0 %v532
  %620 = vmatpush.msra.mxu0 %v528
  %621 = vmatpush.msra.mxu0 %v524
  %622 = vmatpush.msra.mxu0 %v520
  %623 = vmatpush.msra.mxu0 %v516
  %624 = vmatpush.msra.mxu0 %v512
  %625 = vmatpush.msra.mxu0 %v508
  %626 = vmatmul.f32.gmra.mxu0 %v491
  %v627 = vpop.f32.mrf.mxu0
  %v628 = vadd.f32 0.0, %v627
  %629 = vdwg.mxu0
  %630 = vmatpush.msra.mxu0 %v569
  %631 = vmatpush.msra.mxu0 %v565
  %632 = vmatpush.msra.mxu0 %v561
  %633 = vmatpush.msra.mxu0 %v557
  %634 = vmatpush.msra.mxu0 %v553
  %635 = vmatpush.msra.mxu0 %v549
  %636 = vmatpush.msra.mxu0 %v545
  %637 = vmatpush.msra.mxu0 %v541
  %638 = vmatpush.msra.mxu0 %v537
  %639 = vmatpush.msra.mxu0 %v533
  %640 = vmatpush.msra.mxu0 %v529
  %641 = vmatpush.msra.mxu0 %v525
  %642 = vmatpush.msra.mxu0 %v521
  %643 = vmatpush.msra.mxu0 %v517
  %644 = vmatpush.msra.mxu0 %v513
  %645 = vmatpush.msra.mxu0 %v509
  %646 = vmatmul.f32.gmra.mxu0 %v491
  %v647 = vpop.f32.mrf.mxu0
  %v648 = vadd.f32 0.0, %v647
  %649 = vdwg.mxu0
  %v650 = vadd.f32 %v502, %v588
  %v651 = vadd.f32 %v503, %v608
  %v652 = vadd.f32 %v504, %v628
  %v653 = vadd.f32 %v505, %v648
  %v654 = vxor.u32 %v650, 2147483648
  %v655 = vxor.u32 %v651, 2147483648
  %v656 = vxor.u32 %v652, 2147483648
  %v657 = vmul.f32 %v654, 1.442695
  %v658 = vpow.pop %v657
  %v659 = vmul.f32 %v655, 1.442695
  %v660 = vpow.pop %v659
  %v661 = vmul.f32 %v656, 1.442695
  %v662 = vpow.pop %v661
  %v663 = vadd.f32 %v658, 1.0
  %v664 = vadd.f32 %v660, 1.0
  %v665 = vadd.f32 %v662, 1.0
  %v666 = vrcp.pop %v663
  %v667 = vmul.f32 %v663, %v666
  %v668 = vsub.f32 1.0, %v667
  %v669 = vmul.f32 %v666, %v668
  %v670 = vadd.f32 %v666, %v669
  %vm671 = vweird.f32 %v663
  %vm672 = vweird.f32 %v666
  %vm673 = vmor %vm671, %vm672
  %v674 = vsel %vm673, %v666, %v670
  %v675 = vand.u32 2147483647, %v663
  %vm676 = vcmp.eq.f32.partialorder %v675, 8.507059e+37
  %v677 = vand.u32 %v663, 2147483648
  %v678 = vor.u32 1.1754944e-38, %v677
  %v679 = vsel %vm676, %v678, %v674
  %v680 = vmul.f32 1.0, %v679
  %v681 = vrcp.pop %v664
  %v682 = vmul.f32 %v664, %v681
  %v683 = vsub.f32 1.0, %v682
  %v684 = vmul.f32 %v681, %v683
  %v685 = vadd.f32 %v681, %v684
  %vm686 = vweird.f32 %v664
  %vm687 = vweird.f32 %v681
  %vm688 = vmor %vm686, %vm687
  %v689 = vsel %vm688, %v681, %v685
  %v690 = vand.u32 2147483647, %v664
  %vm691 = vcmp.eq.f32.partialorder %v690, 8.507059e+37
  %v692 = vand.u32 %v664, 2147483648
  %v693 = vor.u32 1.1754944e-38, %v692
  %v694 = vsel %vm691, %v693, %v689
  %v695 = vmul.f32 1.0, %v694
  %v696 = vrcp.pop %v665
  %v697 = vmul.f32 %v665, %v696
  %v698 = vsub.f32 1.0, %v697
  %v699 = vmul.f32 %v696, %v698
  %v700 = vadd.f32 %v696, %v699
  %vm701 = vweird.f32 %v665
  %vm702 = vweird.f32 %v696
  %vm703 = vmor %vm701, %vm702
  %v704 = vsel %vm703, %v696, %v700
  %v705 = vand.u32 2147483647, %v665
  %vm706 = vcmp.eq.f32.partialorder %v705, 8.507059e+37
  %v707 = vand.u32 %v665, 2147483648
  %v708 = vor.u32 1.1754944e-38, %v707
  %v709 = vsel %vm706, %v708, %v704
  %v710 = vmul.f32 1.0, %v709
  %v711 = vtanh.pop %v653
  %v712 = vmul.f32 %v695, %v489
  %v713 = vmul.f32 %v680, %v711
  %v714 = vadd.f32 %v712, %v713
  %v715 = vtanh.pop %v714
  %v716 = vmul.f32 %v710, %v715
  %s717 = sadd.s32 %s274, 1
  %v718 = vstv %s717
  %vm719 = vcmp.lt.s32.totalorder %v718, %v273
  %v720 = vsel %vm719, 1, 0
  %721 = vset.pattern.permute.xlu0 0
  %722 = vperm.xlu0 %721, %v720
  %v723 = vpop.permute.xlu0 %722
  %vm724 = vcmp.eq.s32.totalorder %v723, 1
  %v725 = vsel %vm724, %v716, 0.0
  %726 = vst [vmem:[%s5 + $0x8] sm:$0xff] %v725
  %s727 = scalar_lea.vmem [#allocation2], 64
  %v728 = vld [vmem:[%s727] sm:$0xff]
  %v729 = vld [vmem:[%s727 + $0x8] sm:$0xff]
  %v730 = vld [vmem:[%s727 + $0x10] sm:$0xff]
  %v731 = vld [vmem:[%s727 + $0x18] sm:$0xff]
  %v732 = vld [vmem:[%s4] sm:$0xff]
  %v733 = vld [vmem:[%s4 + $0x8] sm:$0xff]
  %v734 = vld [vmem:[%s4 + $0x10] sm:$0xff]
  %v735 = vld [vmem:[%s4 + $0x18] sm:$0xff]
  %v736 = vld [vmem:[%s4 + $0x20] sm:$0xff]
  %v737 = vld [vmem:[%s4 + $0x28] sm:$0xff]
  %v738 = vld [vmem:[%s4 + $0x30] sm:$0xff]
  %v739 = vld [vmem:[%s4 + $0x38] sm:$0xff]
  %v740 = vld [vmem:[%s4 + $0x40] sm:$0xff]
  %v741 = vld [vmem:[%s4 + $0x48] sm:$0xff]
  %v742 = vld [vmem:[%s4 + $0x50] sm:$0xff]
  %v743 = vld [vmem:[%s4 + $0x58] sm:$0xff]
  %v744 = vld [vmem:[%s4 + $0x60] sm:$0xff]
  %v745 = vld [vmem:[%s4 + $0x68] sm:$0xff]
  %v746 = vld [vmem:[%s4 + $0x70] sm:$0xff]
  %v747 = vld [vmem:[%s4 + $0x78] sm:$0xff]
  %v748 = vld [vmem:[%s4 + $0x80] sm:$0xff]
  %v749 = vld [vmem:[%s4 + $0x88] sm:$0xff]
  %v750 = vld [vmem:[%s4 + $0x90] sm:$0xff]
  %v751 = vld [vmem:[%s4 + $0x98] sm:$0xff]
  %v752 = vld [vmem:[%s4 + $0xa0] sm:$0xff]
  %v753 = vld [vmem:[%s4 + $0xa8] sm:$0xff]
  %v754 = vld [vmem:[%s4 + $0xb0] sm:$0xff]
  %v755 = vld [vmem:[%s4 + $0xb8] sm:$0xff]
  %v756 = vld [vmem:[%s4 + $0xc0] sm:$0xff]
  %v757 = vld [vmem:[%s4 + $0xc8] sm:$0xff]
  %v758 = vld [vmem:[%s4 + $0xd0] sm:$0xff]
  %v759 = vld [vmem:[%s4 + $0xd8] sm:$0xff]
  %v760 = vld [vmem:[%s4 + $0xe0] sm:$0xff]
  %v761 = vld [vmem:[%s4 + $0xe8] sm:$0xff]
  %v762 = vld [vmem:[%s4 + $0xf0] sm:$0xff]
  %v763 = vld [vmem:[%s4 + $0xf8] sm:$0xff]
  %v764 = vld [vmem:[%s4 + $0x100] sm:$0xff]
  %v765 = vld [vmem:[%s4 + $0x108] sm:$0xff]
  %v766 = vld [vmem:[%s4 + $0x110] sm:$0xff]
  %v767 = vld [vmem:[%s4 + $0x118] sm:$0xff]
  %v768 = vld [vmem:[%s4 + $0x120] sm:$0xff]
  %v769 = vld [vmem:[%s4 + $0x128] sm:$0xff]
  %v770 = vld [vmem:[%s4 + $0x130] sm:$0xff]
  %v771 = vld [vmem:[%s4 + $0x138] sm:$0xff]
  %v772 = vld [vmem:[%s4 + $0x140] sm:$0xff]
  %v773 = vld [vmem:[%s4 + $0x148] sm:$0xff]
  %v774 = vld [vmem:[%s4 + $0x150] sm:$0xff]
  %v775 = vld [vmem:[%s4 + $0x158] sm:$0xff]
  %v776 = vld [vmem:[%s4 + $0x160] sm:$0xff]
  %v777 = vld [vmem:[%s4 + $0x168] sm:$0xff]
  %v778 = vld [vmem:[%s4 + $0x170] sm:$0xff]
  %v779 = vld [vmem:[%s4 + $0x178] sm:$0xff]
  %v780 = vld [vmem:[%s4 + $0x180] sm:$0xff]
  %v781 = vld [vmem:[%s4 + $0x188] sm:$0xff]
  %v782 = vld [vmem:[%s4 + $0x190] sm:$0xff]
  %v783 = vld [vmem:[%s4 + $0x198] sm:$0xff]
  %v784 = vld [vmem:[%s4 + $0x1a0] sm:$0xff]
  %v785 = vld [vmem:[%s4 + $0x1a8] sm:$0xff]
  %v786 = vld [vmem:[%s4 + $0x1b0] sm:$0xff]
  %v787 = vld [vmem:[%s4 + $0x1b8] sm:$0xff]
  %v788 = vld [vmem:[%s4 + $0x1c0] sm:$0xff]
  %v789 = vld [vmem:[%s4 + $0x1c8] sm:$0xff]
  %v790 = vld [vmem:[%s4 + $0x1d0] sm:$0xff]
  %v791 = vld [vmem:[%s4 + $0x1d8] sm:$0xff]
  %v792 = vld [vmem:[%s4 + $0x1e0] sm:$0xff]
  %v793 = vld [vmem:[%s4 + $0x1e8] sm:$0xff]
  %v794 = vld [vmem:[%s4 + $0x1f0] sm:$0xff]
  %v795 = vld [vmem:[%s4 + $0x1f8] sm:$0xff]
  %796 = vmatpush.msra.mxu0 %v792
  %797 = vmatpush.msra.mxu0 %v788
  %798 = vmatpush.msra.mxu0 %v784
  %799 = vmatpush.msra.mxu0 %v780
  %800 = vmatpush.msra.mxu0 %v776
  %801 = vmatpush.msra.mxu0 %v772
  %802 = vmatpush.msra.mxu0 %v768
  %803 = vmatpush.msra.mxu0 %v764
  %804 = vmatpush.msra.mxu0 %v760
  %805 = vmatpush.msra.mxu0 %v756
  %806 = vmatpush.msra.mxu0 %v752
  %807 = vmatpush.msra.mxu0 %v748
  %808 = vmatpush.msra.mxu0 %v744
  %809 = vmatpush.msra.mxu0 %v740
  %810 = vmatpush.msra.mxu0 %v736
  %811 = vmatpush.msra.mxu0 %v732
  %812 = vmatmul.f32.gmra.mxu0 %v716
  %v813 = vpop.f32.mrf.mxu0
  %v814 = vadd.f32 0.0, %v813
  %815 = vdwg.mxu0
  %816 = vmatpush.msra.mxu0 %v793
  %817 = vmatpush.msra.mxu0 %v789
  %818 = vmatpush.msra.mxu0 %v785
  %819 = vmatpush.msra.mxu0 %v781
  %820 = vmatpush.msra.mxu0 %v777
  %821 = vmatpush.msra.mxu0 %v773
  %822 = vmatpush.msra.mxu0 %v769
  %823 = vmatpush.msra.mxu0 %v765
  %824 = vmatpush.msra.mxu0 %v761
  %825 = vmatpush.msra.mxu0 %v757
  %826 = vmatpush.msra.mxu0 %v753
  %827 = vmatpush.msra.mxu0 %v749
  %828 = vmatpush.msra.mxu0 %v745
  %829 = vmatpush.msra.mxu0 %v741
  %830 = vmatpush.msra.mxu0 %v737
  %831 = vmatpush.msra.mxu0 %v733
  %832 = vmatmul.f32.gmra.mxu0 %v716
  %v833 = vpop.f32.mrf.mxu0
  %v834 = vadd.f32 0.0, %v833
  %835 = vdwg.mxu0
  %836 = vmatpush.msra.mxu0 %v794
  %837 = vmatpush.msra.mxu0 %v790
  %838 = vmatpush.msra.mxu0 %v786
  %839 = vmatpush.msra.mxu0 %v782
  %840 = vmatpush.msra.mxu0 %v778
  %841 = vmatpush.msra.mxu0 %v774
  %842 = vmatpush.msra.mxu0 %v770
  %843 = vmatpush.msra.mxu0 %v766
  %844 = vmatpush.msra.mxu0 %v762
  %845 = vmatpush.msra.mxu0 %v758
  %846 = vmatpush.msra.mxu0 %v754
  %847 = vmatpush.msra.mxu0 %v750
  %848 = vmatpush.msra.mxu0 %v746
  %849 = vmatpush.msra.mxu0 %v742
  %850 = vmatpush.msra.mxu0 %v738
  %851 = vmatpush.msra.mxu0 %v734
  %852 = vmatmul.f32.gmra.mxu0 %v716
  %v853 = vpop.f32.mrf.mxu0
  %v854 = vadd.f32 0.0, %v853
  %855 = vdwg.mxu0
  %856 = vmatpush.msra.mxu0 %v795
  %857 = vmatpush.msra.mxu0 %v791
  %858 = vmatpush.msra.mxu0 %v787
  %859 = vmatpush.msra.mxu0 %v783
  %860 = vmatpush.msra.mxu0 %v779
  %861 = vmatpush.msra.mxu0 %v775
  %862 = vmatpush.msra.mxu0 %v771
  %863 = vmatpush.msra.mxu0 %v767
  %864 = vmatpush.msra.mxu0 %v763
  %865 = vmatpush.msra.mxu0 %v759
  %866 = vmatpush.msra.mxu0 %v755
  %867 = vmatpush.msra.mxu0 %v751
  %868 = vmatpush.msra.mxu0 %v747
  %869 = vmatpush.msra.mxu0 %v743
  %870 = vmatpush.msra.mxu0 %v739
  %871 = vmatpush.msra.mxu0 %v735
  %872 = vmatmul.f32.gmra.mxu0 %v716
  %v873 = vpop.f32.mrf.mxu0
  %v874 = vadd.f32 0.0, %v873
  %875 = vdwg.mxu0
  %v876 = vadd.f32 %v728, %v814
  %v877 = vadd.f32 %v729, %v834
  %v878 = vadd.f32 %v730, %v854
  %v879 = vadd.f32 %v731, %v874
  %v880 = vxor.u32 %v876, 2147483648
  %v881 = vxor.u32 %v877, 2147483648
  %v882 = vxor.u32 %v878, 2147483648
  %v883 = vmul.f32 %v880, 1.442695
  %v884 = vpow.pop %v883
  %v885 = vmul.f32 %v881, 1.442695
  %v886 = vpow.pop %v885
  %v887 = vmul.f32 %v882, 1.442695
  %v888 = vpow.pop %v887
  %v889 = vadd.f32 %v884, 1.0
  %v890 = vadd.f32 %v886, 1.0
  %v891 = vadd.f32 %v888, 1.0
  %v892 = vrcp.pop %v889
  %v893 = vmul.f32 %v889, %v892
  %v894 = vsub.f32 1.0, %v893
  %v895 = vmul.f32 %v892, %v894
  %v896 = vadd.f32 %v892, %v895
  %vm897 = vweird.f32 %v889
  %vm898 = vweird.f32 %v892
  %vm899 = vmor %vm897, %vm898
  %v900 = vsel %vm899, %v892, %v896
  %v901 = vand.u32 2147483647, %v889
  %vm902 = vcmp.eq.f32.partialorder %v901, 8.507059e+37
  %v903 = vand.u32 %v889, 2147483648
  %v904 = vor.u32 1.1754944e-38, %v903
  %v905 = vsel %vm902, %v904, %v900
  %v906 = vmul.f32 1.0, %v905
  %v907 = vrcp.pop %v890
  %v908 = vmul.f32 %v890, %v907
  %v909 = vsub.f32 1.0, %v908
  %v910 = vmul.f32 %v907, %v909
  %v911 = vadd.f32 %v907, %v910
  %vm912 = vweird.f32 %v890
  %vm913 = vweird.f32 %v907
  %vm914 = vmor %vm912, %vm913
  %v915 = vsel %vm914, %v907, %v911
  %v916 = vand.u32 2147483647, %v890
  %vm917 = vcmp.eq.f32.partialorder %v916, 8.507059e+37
  %v918 = vand.u32 %v890, 2147483648
  %v919 = vor.u32 1.1754944e-38, %v918
  %v920 = vsel %vm917, %v919, %v915
  %v921 = vmul.f32 1.0, %v920
  %v922 = vrcp.pop %v891
  %v923 = vmul.f32 %v891, %v922
  %v924 = vsub.f32 1.0, %v923
  %v925 = vmul.f32 %v922, %v924
  %v926 = vadd.f32 %v922, %v925
  %vm927 = vweird.f32 %v891
  %vm928 = vweird.f32 %v922
  %vm929 = vmor %vm927, %vm928
  %v930 = vsel %vm929, %v922, %v926
  %v931 = vand.u32 2147483647, %v891
  %vm932 = vcmp.eq.f32.partialorder %v931, 8.507059e+37
  %v933 = vand.u32 %v891, 2147483648
  %v934 = vor.u32 1.1754944e-38, %v933
  %v935 = vsel %vm932, %v934, %v930
  %v936 = vmul.f32 1.0, %v935
  %v937 = vtanh.pop %v879
  %v938 = vmul.f32 %v921, %v714
  %v939 = vmul.f32 %v906, %v937
  %v940 = vadd.f32 %v938, %v939
  %v941 = vtanh.pop %v940
  %v942 = vmul.f32 %v936, %v941
  %s943 = sadd.s32 %s274, 2
  %v944 = vstv %s943
  %vm945 = vcmp.lt.s32.totalorder %v944, %v273
  %v946 = vsel %vm945, 1, 0
  %947 = vset.pattern.permute.xlu0 0
  %948 = vperm.xlu0 %947, %v946
  %v949 = vpop.permute.xlu0 %948
  %vm950 = vcmp.eq.s32.totalorder %v949, 1
  %v951 = vsel %vm950, %v942, 0.0
  %952 = vst [vmem:[%s5 + $0x10] sm:$0xff] %v951
  %s953 = scalar_lea.vmem [#allocation2], 96
  %v954 = vld [vmem:[%s953] sm:$0xff]
  %v955 = vld [vmem:[%s953 + $0x8] sm:$0xff]
  %v956 = vld [vmem:[%s953 + $0x10] sm:$0xff]
  %v957 = vld [vmem:[%s953 + $0x18] sm:$0xff]
  %v958 = vld [vmem:[%s4] sm:$0xff]
  %v959 = vld [vmem:[%s4 + $0x8] sm:$0xff]
  %v960 = vld [vmem:[%s4 + $0x10] sm:$0xff]
  %v961 = vld [vmem:[%s4 + $0x18] sm:$0xff]
  %v962 = vld [vmem:[%s4 + $0x20] sm:$0xff]
  %v963 = vld [vmem:[%s4 + $0x28] sm:$0xff]
  %v964 = vld [vmem:[%s4 + $0x30] sm:$0xff]
  %v965 = vld [vmem:[%s4 + $0x38] sm:$0xff]
  %v966 = vld [vmem:[%s4 + $0x40] sm:$0xff]
  %v967 = vld [vmem:[%s4 + $0x48] sm:$0xff]
  %v968 = vld [vmem:[%s4 + $0x50] sm:$0xff]
  %v969 = vld [vmem:[%s4 + $0x58] sm:$0xff]
  %v970 = vld [vmem:[%s4 + $0x60] sm:$0xff]
  %v971 = vld [vmem:[%s4 + $0x68] sm:$0xff]
  %v972 = vld [vmem:[%s4 + $0x70] sm:$0xff]
  %v973 = vld [vmem:[%s4 + $0x78] sm:$0xff]
  %v974 = vld [vmem:[%s4 + $0x80] sm:$0xff]
  %v975 = vld [vmem:[%s4 + $0x88] sm:$0xff]
  %v976 = vld [vmem:[%s4 + $0x90] sm:$0xff]
  %v977 = vld [vmem:[%s4 + $0x98] sm:$0xff]
  %v978 = vld [vmem:[%s4 + $0xa0] sm:$0xff]
  %v979 = vld [vmem:[%s4 + $0xa8] sm:$0xff]
  %v980 = vld [vmem:[%s4 + $0xb0] sm:$0xff]
  %v981 = vld [vmem:[%s4 + $0xb8] sm:$0xff]
  %v982 = vld [vmem:[%s4 + $0xc0] sm:$0xff]
  %v983 = vld [vmem:[%s4 + $0xc8] sm:$0xff]
  %v984 = vld [vmem:[%s4 + $0xd0] sm:$0xff]
  %v985 = vld [vmem:[%s4 + $0xd8] sm:$0xff]
  %v986 = vld [vmem:[%s4 + $0xe0] sm:$0xff]
  %v987 = vld [vmem:[%s4 + $0xe8] sm:$0xff]
  %v988 = vld [vmem:[%s4 + $0xf0] sm:$0xff]
  %v989 = vld [vmem:[%s4 + $0xf8] sm:$0xff]
  %v990 = vld [vmem:[%s4 + $0x100] sm:$0xff]
  %v991 = vld [vmem:[%s4 + $0x108] sm:$0xff]
  %v992 = vld [vmem:[%s4 + $0x110] sm:$0xff]
  %v993 = vld [vmem:[%s4 + $0x118] sm:$0xff]
  %v994 = vld [vmem:[%s4 + $0x120] sm:$0xff]
  %v995 = vld [vmem:[%s4 + $0x128] sm:$0xff]
  %v996 = vld [vmem:[%s4 + $0x130] sm:$0xff]
  %v997 = vld [vmem:[%s4 + $0x138] sm:$0xff]
  %v998 = vld [vmem:[%s4 + $0x140] sm:$0xff]
  %v999 = vld [vmem:[%s4 + $0x148] sm:$0xff]
  %v1000 = vld [vmem:[%s4 + $0x150] sm:$0xff]
  %v1001 = vld [vmem:[%s4 + $0x158] sm:$0xff]
  %v1002 = vld [vmem:[%s4 + $0x160] sm:$0xff]
  %v1003 = vld [vmem:[%s4 + $0x168] sm:$0xff]
  %v1004 = vld [vmem:[%s4 + $0x170] sm:$0xff]
  %v1005 = vld [vmem:[%s4 + $0x178] sm:$0xff]
  %v1006 = vld [vmem:[%s4 + $0x180] sm:$0xff]
  %v1007 = vld [vmem:[%s4 + $0x188] sm:$0xff]
  %v1008 = vld [vmem:[%s4 + $0x190] sm:$0xff]
  %v1009 = vld [vmem:[%s4 + $0x198] sm:$0xff]
  %v1010 = vld [vmem:[%s4 + $0x1a0] sm:$0xff]
  %v1011 = vld [vmem:[%s4 + $0x1a8] sm:$0xff]
  %v1012 = vld [vmem:[%s4 + $0x1b0] sm:$0xff]
  %v1013 = vld [vmem:[%s4 + $0x1b8] sm:$0xff]
  %v1014 = vld [vmem:[%s4 + $0x1c0] sm:$0xff]
  %v1015 = vld [vmem:[%s4 + $0x1c8] sm:$0xff]
  %v1016 = vld [vmem:[%s4 + $0x1d0] sm:$0xff]
  %v1017 = vld [vmem:[%s4 + $0x1d8] sm:$0xff]
  %v1018 = vld [vmem:[%s4 + $0x1e0] sm:$0xff]
  %v1019 = vld [vmem:[%s4 + $0x1e8] sm:$0xff]
  %v1020 = vld [vmem:[%s4 + $0x1f0] sm:$0xff]
  %v1021 = vld [vmem:[%s4 + $0x1f8] sm:$0xff]
  %1022 = vmatpush.msra.mxu0 %v1018
  %1023 = vmatpush.msra.mxu0 %v1014
  %1024 = vmatpush.msra.mxu0 %v1010
  %1025 = vmatpush.msra.mxu0 %v1006
  %1026 = vmatpush.msra.mxu0 %v1002
  %1027 = vmatpush.msra.mxu0 %v998
  %1028 = vmatpush.msra.mxu0 %v994
  %1029 = vmatpush.msra.mxu0 %v990
  %1030 = vmatpush.msra.mxu0 %v986
  %1031 = vmatpush.msra.mxu0 %v982
  %1032 = vmatpush.msra.mxu0 %v978
  %1033 = vmatpush.msra.mxu0 %v974
  %1034 = vmatpush.msra.mxu0 %v970
  %1035 = vmatpush.msra.mxu0 %v966
  %1036 = vmatpush.msra.mxu0 %v962
  %1037 = vmatpush.msra.mxu0 %v958
  %1038 = vmatmul.f32.gmra.mxu0 %v942
  %v1039 = vpop.f32.mrf.mxu0
  %v1040 = vadd.f32 0.0, %v1039
  %1041 = vdwg.mxu0
  %1042 = vmatpush.msra.mxu0 %v1019
  %1043 = vmatpush.msra.mxu0 %v1015
  %1044 = vmatpush.msra.mxu0 %v1011
  %1045 = vmatpush.msra.mxu0 %v1007
  %1046 = vmatpush.msra.mxu0 %v1003
  %1047 = vmatpush.msra.mxu0 %v999
  %1048 = vmatpush.msra.mxu0 %v995
  %1049 = vmatpush.msra.mxu0 %v991
  %1050 = vmatpush.msra.mxu0 %v987
  %1051 = vmatpush.msra.mxu0 %v983
  %1052 = vmatpush.msra.mxu0 %v979
  %1053 = vmatpush.msra.mxu0 %v975
  %1054 = vmatpush.msra.mxu0 %v971
  %1055 = vmatpush.msra.mxu0 %v967
  %1056 = vmatpush.msra.mxu0 %v963
  %1057 = vmatpush.msra.mxu0 %v959
  %1058 = vmatmul.f32.gmra.mxu0 %v942
  %v1059 = vpop.f32.mrf.mxu0
  %v1060 = vadd.f32 0.0, %v1059
  %1061 = vdwg.mxu0
  %1062 = vmatpush.msra.mxu0 %v1020
  %1063 = vmatpush.msra.mxu0 %v1016
  %1064 = vmatpush.msra.mxu0 %v1012
  %1065 = vmatpush.msra.mxu0 %v1008
  %1066 = vmatpush.msra.mxu0 %v1004
  %1067 = vmatpush.msra.mxu0 %v1000
  %1068 = vmatpush.msra.mxu0 %v996
  %1069 = vmatpush.msra.mxu0 %v992
  %1070 = vmatpush.msra.mxu0 %v988
  %1071 = vmatpush.msra.mxu0 %v984
  %1072 = vmatpush.msra.mxu0 %v980
  %1073 = vmatpush.msra.mxu0 %v976
  %1074 = vmatpush.msra.mxu0 %v972
  %1075 = vmatpush.msra.mxu0 %v968
  %1076 = vmatpush.msra.mxu0 %v964
  %1077 = vmatpush.msra.mxu0 %v960
  %1078 = vmatmul.f32.gmra.mxu0 %v942
  %v1079 = vpop.f32.mrf.mxu0
  %v1080 = vadd.f32 0.0, %v1079
  %1081 = vdwg.mxu0
  %1082 = vmatpush.msra.mxu0 %v1021
  %1083 = vmatpush.msra.mxu0 %v1017
  %1084 = vmatpush.msra.mxu0 %v1013
  %1085 = vmatpush.msra.mxu0 %v1009
  %1086 = vmatpush.msra.mxu0 %v1005
  %1087 = vmatpush.msra.mxu0 %v1001
  %1088 = vmatpush.msra.mxu0 %v997
  %1089 = vmatpush.msra.mxu0 %v993
  %1090 = vmatpush.msra.mxu0 %v989
  %1091 = vmatpush.msra.mxu0 %v985
  %1092 = vmatpush.msra.mxu0 %v981
  %1093 = vmatpush.msra.mxu0 %v977
  %1094 = vmatpush.msra.mxu0 %v973
  %1095 = vmatpush.msra.mxu0 %v969
  %1096 = vmatpush.msra.mxu0 %v965
  %1097 = vmatpush.msra.mxu0 %v961
  %1098 = vmatmul.f32.gmra.mxu0 %v942
  %v1099 = vpop.f32.mrf.mxu0
  %v1100 = vadd.f32 0.0, %v1099
  %1101 = vdwg.mxu0
  %v1102 = vadd.f32 %v954, %v1040
  %v1103 = vadd.f32 %v955, %v1060
  %v1104 = vadd.f32 %v956, %v1080
  %v1105 = vadd.f32 %v957, %v1100
  %v1106 = vxor.u32 %v1102, 2147483648
  %v1107 = vxor.u32 %v1103, 2147483648
  %v1108 = vxor.u32 %v1104, 2147483648
  %v1109 = vmul.f32 %v1106, 1.442695
  %v1110 = vpow.pop %v1109
  %v1111 = vmul.f32 %v1107, 1.442695
  %v1112 = vpow.pop %v1111
  %v1113 = vmul.f32 %v1108, 1.442695
  %v1114 = vpow.pop %v1113
  %v1115 = vadd.f32 %v1110, 1.0
  %v1116 = vadd.f32 %v1112, 1.0
  %v1117 = vadd.f32 %v1114, 1.0
  %v1118 = vrcp.pop %v1115
  %v1119 = vmul.f32 %v1115, %v1118
  %v1120 = vsub.f32 1.0, %v1119
  %v1121 = vmul.f32 %v1118, %v1120
  %v1122 = vadd.f32 %v1118, %v1121
  %vm1123 = vweird.f32 %v1115
  %vm1124 = vweird.f32 %v1118
  %vm1125 = vmor %vm1123, %vm1124
  %v1126 = vsel %vm1125, %v1118, %v1122
  %v1127 = vand.u32 2147483647, %v1115
  %vm1128 = vcmp.eq.f32.partialorder %v1127, 8.507059e+37
  %v1129 = vand.u32 %v1115, 2147483648
  %v1130 = vor.u32 1.1754944e-38, %v1129
  %v1131 = vsel %vm1128, %v1130, %v1126
  %v1132 = vmul.f32 1.0, %v1131
  %v1133 = vrcp.pop %v1116
  %v1134 = vmul.f32 %v1116, %v1133
  %v1135 = vsub.f32 1.0, %v1134
  %v1136 = vmul.f32 %v1133, %v1135
  %v1137 = vadd.f32 %v1133, %v1136
  %vm1138 = vweird.f32 %v1116
  %vm1139 = vweird.f32 %v1133
  %vm1140 = vmor %vm1138, %vm1139
  %v1141 = vsel %vm1140, %v1133, %v1137
  %v1142 = vand.u32 2147483647, %v1116
  %vm1143 = vcmp.eq.f32.partialorder %v1142, 8.507059e+37
  %v1144 = vand.u32 %v1116, 2147483648
  %v1145 = vor.u32 1.1754944e-38, %v1144
  %v1146 = vsel %vm1143, %v1145, %v1141
  %v1147 = vmul.f32 1.0, %v1146
  %v1148 = vrcp.pop %v1117
  %v1149 = vmul.f32 %v1117, %v1148
  %v1150 = vsub.f32 1.0, %v1149
  %v1151 = vmul.f32 %v1148, %v1150
  %v1152 = vadd.f32 %v1148, %v1151
  %vm1153 = vweird.f32 %v1117
  %vm1154 = vweird.f32 %v1148
  %vm1155 = vmor %vm1153, %vm1154
  %v1156 = vsel %vm1155, %v1148, %v1152
  %v1157 = vand.u32 2147483647, %v1117
  %vm1158 = vcmp.eq.f32.partialorder %v1157, 8.507059e+37
  %v1159 = vand.u32 %v1117, 2147483648
  %v1160 = vor.u32 1.1754944e-38, %v1159
  %v1161 = vsel %vm1158, %v1160, %v1156
  %v1162 = vmul.f32 1.0, %v1161
  %v1163 = vtanh.pop %v1105
  %v1164 = vmul.f32 %v1147, %v940
  %v1165 = vmul.f32 %v1132, %v1163
  %v1166 = vadd.f32 %v1164, %v1165
  %v1167 = vtanh.pop %v1166
  %v1168 = vmul.f32 %v1162, %v1167
  %s1169 = sadd.s32 %s274, 3
  %v1170 = vstv %s1169
  %vm1171 = vcmp.lt.s32.totalorder %v1170, %v273
  %v1172 = vsel %vm1171, 1, 0
  %1173 = vset.pattern.permute.xlu0 0
  %1174 = vperm.xlu0 %1173, %v1172
  %v1175 = vpop.permute.xlu0 %1174
  %vm1176 = vcmp.eq.s32.totalorder %v1175, 1
  %v1177 = vsel %vm1176, %v1168, 0.0
  %1178 = vst [vmem:[%s5 + $0x18] sm:$0xff] %v1177
  %s1179 = scalar_lea.vmem [#allocation2], 128
  %v1180 = vld [vmem:[%s1179] sm:$0xff]
  %v1181 = vld [vmem:[%s1179 + $0x8] sm:$0xff]
  %v1182 = vld [vmem:[%s1179 + $0x10] sm:$0xff]
  %v1183 = vld [vmem:[%s1179 + $0x18] sm:$0xff]
  %v1184 = vld [vmem:[%s4] sm:$0xff]
  %v1185 = vld [vmem:[%s4 + $0x8] sm:$0xff]
  %v1186 = vld [vmem:[%s4 + $0x10] sm:$0xff]
  %v1187 = vld [vmem:[%s4 + $0x18] sm:$0xff]
  %v1188 = vld [vmem:[%s4 + $0x20] sm:$0xff]
  %v1189 = vld [vmem:[%s4 + $0x28] sm:$0xff]
  %v1190 = vld [vmem:[%s4 + $0x30] sm:$0xff]
  %v1191 = vld [vmem:[%s4 + $0x38] sm:$0xff]
  %v1192 = vld [vmem:[%s4 + $0x40] sm:$0xff]
  %v1193 = vld [vmem:[%s4 + $0x48] sm:$0xff]
  %v1194 = vld [vmem:[%s4 + $0x50] sm:$0xff]
  %v1195 = vld [vmem:[%s4 + $0x58] sm:$0xff]
  %v1196 = vld [vmem:[%s4 + $0x60] sm:$0xff]
  %v1197 = vld [vmem:[%s4 + $0x68] sm:$0xff]
  %v1198 = vld [vmem:[%s4 + $0x70] sm:$0xff]
  %v1199 = vld [vmem:[%s4 + $0x78] sm:$0xff]
  %v1200 = vld [vmem:[%s4 + $0x80] sm:$0xff]
  %v1201 = vld [vmem:[%s4 + $0x88] sm:$0xff]
  %v1202 = vld [vmem:[%s4 + $0x90] sm:$0xff]
  %v1203 = vld [vmem:[%s4 + $0x98] sm:$0xff]
  %v1204 = vld [vmem:[%s4 + $0xa0] sm:$0xff]
  %v1205 = vld [vmem:[%s4 + $0xa8] sm:$0xff]
  %v1206 = vld [vmem:[%s4 + $0xb0] sm:$0xff]
  %v1207 = vld [vmem:[%s4 + $0xb8] sm:$0xff]
  %v1208 = vld [vmem:[%s4 + $0xc0] sm:$0xff]
  %v1209 = vld [vmem:[%s4 + $0xc8] sm:$0xff]
  %v1210 = vld [vmem:[%s4 + $0xd0] sm:$0xff]
  %v1211 = vld [vmem:[%s4 + $0xd8] sm:$0xff]
  %v1212 = vld [vmem:[%s4 + $0xe0] sm:$0xff]
  %v1213 = vld [vmem:[%s4 + $0xe8] sm:$0xff]
  %v1214 = vld [vmem:[%s4 + $0xf0] sm:$0xff]
  %v1215 = vld [vmem:[%s4 + $0xf8] sm:$0xff]
  %v1216 = vld [vmem:[%s4 + $0x100] sm:$0xff]
  %v1217 = vld [vmem:[%s4 + $0x108] sm:$0xff]
  %v1218 = vld [vmem:[%s4 + $0x110] sm:$0xff]
  %v1219 = vld [vmem:[%s4 + $0x118] sm:$0xff]
  %v1220 = vld [vmem:[%s4 + $0x120] sm:$0xff]
  %v1221 = vld [vmem:[%s4 + $0x128] sm:$0xff]
  %v1222 = vld [vmem:[%s4 + $0x130] sm:$0xff]
  %v1223 = vld [vmem:[%s4 + $0x138] sm:$0xff]
  %v1224 = vld [vmem:[%s4 + $0x140] sm:$0xff]
  %v1225 = vld [vmem:[%s4 + $0x148] sm:$0xff]
  %v1226 = vld [vmem:[%s4 + $0x150] sm:$0xff]
  %v1227 = vld [vmem:[%s4 + $0x158] sm:$0xff]
  %v1228 = vld [vmem:[%s4 + $0x160] sm:$0xff]
  %v1229 = vld [vmem:[%s4 + $0x168] sm:$0xff]
  %v1230 = vld [vmem:[%s4 + $0x170] sm:$0xff]
  %v1231 = vld [vmem:[%s4 + $0x178] sm:$0xff]
  %v1232 = vld [vmem:[%s4 + $0x180] sm:$0xff]
  %v1233 = vld [vmem:[%s4 + $0x188] sm:$0xff]
  %v1234 = vld [vmem:[%s4 + $0x190] sm:$0xff]
  %v1235 = vld [vmem:[%s4 + $0x198] sm:$0xff]
  %v1236 = vld [vmem:[%s4 + $0x1a0] sm:$0xff]
  %v1237 = vld [vmem:[%s4 + $0x1a8] sm:$0xff]
  %v1238 = vld [vmem:[%s4 + $0x1b0] sm:$0xff]
  %v1239 = vld [vmem:[%s4 + $0x1b8] sm:$0xff]
  %v1240 = vld [vmem:[%s4 + $0x1c0] sm:$0xff]
  %v1241 = vld [vmem:[%s4 + $0x1c8] sm:$0xff]
  %v1242 = vld [vmem:[%s4 + $0x1d0] sm:$0xff]
  %v1243 = vld [vmem:[%s4 + $0x1d8] sm:$0xff]
  %v1244 = vld [vmem:[%s4 + $0x1e0] sm:$0xff]
  %v1245 = vld [vmem:[%s4 + $0x1e8] sm:$0xff]
  %v1246 = vld [vmem:[%s4 + $0x1f0] sm:$0xff]
  %v1247 = vld [vmem:[%s4 + $0x1f8] sm:$0xff]
  %1248 = vmatpush.msra.mxu0 %v1244
  %1249 = vmatpush.msra.mxu0 %v1240
  %1250 = vmatpush.msra.mxu0 %v1236
  %1251 = vmatpush.msra.mxu0 %v1232
  %1252 = vmatpush.msra.mxu0 %v1228
  %1253 = vmatpush.msra.mxu0 %v1224
  %1254 = vmatpush.msra.mxu0 %v1220
  %1255 = vmatpush.msra.mxu0 %v1216
  %1256 = vmatpush.msra.mxu0 %v1212
  %1257 = vmatpush.msra.mxu0 %v1208
  %1258 = vmatpush.msra.mxu0 %v1204
  %1259 = vmatpush.msra.mxu0 %v1200
  %1260 = vmatpush.msra.mxu0 %v1196
  %1261 = vmatpush.msra.mxu0 %v1192
  %1262 = vmatpush.msra.mxu0 %v1188
  %1263 = vmatpush.msra.mxu0 %v1184
  %1264 = vmatmul.f32.gmra.mxu0 %v1168
  %v1265 = vpop.f32.mrf.mxu0
  %v1266 = vadd.f32 0.0, %v1265
  %1267 = vdwg.mxu0
  %1268 = vmatpush.msra.mxu0 %v1245
  %1269 = vmatpush.msra.mxu0 %v1241
  %1270 = vmatpush.msra.mxu0 %v1237
  %1271 = vmatpush.msra.mxu0 %v1233
  %1272 = vmatpush.msra.mxu0 %v1229
  %1273 = vmatpush.msra.mxu0 %v1225
  %1274 = vmatpush.msra.mxu0 %v1221
  %1275 = vmatpush.msra.mxu0 %v1217
  %1276 = vmatpush.msra.mxu0 %v1213
  %1277 = vmatpush.msra.mxu0 %v1209
  %1278 = vmatpush.msra.mxu0 %v1205
  %1279 = vmatpush.msra.mxu0 %v1201
  %1280 = vmatpush.msra.mxu0 %v1197
  %1281 = vmatpush.msra.mxu0 %v1193
  %1282 = vmatpush.msra.mxu0 %v1189
  %1283 = vmatpush.msra.mxu0 %v1185
  %1284 = vmatmul.f32.gmra.mxu0 %v1168
  %v1285 = vpop.f32.mrf.mxu0
  %v1286 = vadd.f32 0.0, %v1285
  %1287 = vdwg.mxu0
  %1288 = vmatpush.msra.mxu0 %v1246
  %1289 = vmatpush.msra.mxu0 %v1242
  %1290 = vmatpush.msra.mxu0 %v1238
  %1291 = vmatpush.msra.mxu0 %v1234
  %1292 = vmatpush.msra.mxu0 %v1230
  %1293 = vmatpush.msra.mxu0 %v1226
  %1294 = vmatpush.msra.mxu0 %v1222
  %1295 = vmatpush.msra.mxu0 %v1218
  %1296 = vmatpush.msra.mxu0 %v1214
  %1297 = vmatpush.msra.mxu0 %v1210
  %1298 = vmatpush.msra.mxu0 %v1206
  %1299 = vmatpush.msra.mxu0 %v1202
  %1300 = vmatpush.msra.mxu0 %v1198
  %1301 = vmatpush.msra.mxu0 %v1194
  %1302 = vmatpush.msra.mxu0 %v1190
  %1303 = vmatpush.msra.mxu0 %v1186
  %1304 = vmatmul.f32.gmra.mxu0 %v1168
  %v1305 = vpop.f32.mrf.mxu0
  %v1306 = vadd.f32 0.0, %v1305
  %1307 = vdwg.mxu0
  %1308 = vmatpush.msra.mxu0 %v1247
  %1309 = vmatpush.msra.mxu0 %v1243
  %1310 = vmatpush.msra.mxu0 %v1239
  %1311 = vmatpush.msra.mxu0 %v1235
  %1312 = vmatpush.msra.mxu0 %v1231
  %1313 = vmatpush.msra.mxu0 %v1227
  %1314 = vmatpush.msra.mxu0 %v1223
  %1315 = vmatpush.msra.mxu0 %v1219
  %1316 = vmatpush.msra.mxu0 %v1215
  %1317 = vmatpush.msra.mxu0 %v1211
  %1318 = vmatpush.msra.mxu0 %v1207
  %1319 = vmatpush.msra.mxu0 %v1203
  %1320 = vmatpush.msra.mxu0 %v1199
  %1321 = vmatpush.msra.mxu0 %v1195
  %1322 = vmatpush.msra.mxu0 %v1191
  %1323 = vmatpush.msra.mxu0 %v1187
  %1324 = vmatmul.f32.gmra.mxu0 %v1168
  %v1325 = vpop.f32.mrf.mxu0
  %v1326 = vadd.f32 0.0, %v1325
  %1327 = vdwg.mxu0
  %v1328 = vadd.f32 %v1180, %v1266
  %v1329 = vadd.f32 %v1181, %v1286
  %v1330 = vadd.f32 %v1182, %v1306
  %v1331 = vadd.f32 %v1183, %v1326
  %v1332 = vxor.u32 %v1328, 2147483648
  %v1333 = vxor.u32 %v1329, 2147483648
  %v1334 = vxor.u32 %v1330, 2147483648
  %v1335 = vmul.f32 %v1332, 1.442695
  %v1336 = vpow.pop %v1335
  %v1337 = vmul.f32 %v1333, 1.442695
  %v1338 = vpow.pop %v1337
  %v1339 = vmul.f32 %v1334, 1.442695
  %v1340 = vpow.pop %v1339
  %v1341 = vadd.f32 %v1336, 1.0
  %v1342 = vadd.f32 %v1338, 1.0
  %v1343 = vadd.f32 %v1340, 1.0
  %v1344 = vrcp.pop %v1341
  %v1345 = vmul.f32 %v1341, %v1344
  %v1346 = vsub.f32 1.0, %v1345
  %v1347 = vmul.f32 %v1344, %v1346
  %v1348 = vadd.f32 %v1344, %v1347
  %vm1349 = vweird.f32 %v1341
  %vm1350 = vweird.f32 %v1344
  %vm1351 = vmor %vm1349, %vm1350
  %v1352 = vsel %vm1351, %v1344, %v1348
  %v1353 = vand.u32 2147483647, %v1341
  %vm1354 = vcmp.eq.f32.partialorder %v1353, 8.507059e+37
  %v1355 = vand.u32 %v1341, 2147483648
  %v1356 = vor.u32 1.1754944e-38, %v1355
  %v1357 = vsel %vm1354, %v1356, %v1352
  %v1358 = vmul.f32 1.0, %v1357
  %v1359 = vrcp.pop %v1342
  %v1360 = vmul.f32 %v1342, %v1359
  %v1361 = vsub.f32 1.0, %v1360
  %v1362 = vmul.f32 %v1359, %v1361
  %v1363 = vadd.f32 %v1359, %v1362
  %vm1364 = vweird.f32 %v1342
  %vm1365 = vweird.f32 %v1359
  %vm1366 = vmor %vm1364, %vm1365
  %v1367 = vsel %vm1366, %v1359, %v1363
  %v1368 = vand.u32 2147483647, %v1342
  %vm1369 = vcmp.eq.f32.partialorder %v1368, 8.507059e+37
  %v1370 = vand.u32 %v1342, 2147483648
  %v1371 = vor.u32 1.1754944e-38, %v1370
  %v1372 = vsel %vm1369, %v1371, %v1367
  %v1373 = vmul.f32 1.0, %v1372
  %v1374 = vrcp.pop %v1343
  %v1375 = vmul.f32 %v1343, %v1374
  %v1376 = vsub.f32 1.0, %v1375
  %v1377 = vmul.f32 %v1374, %v1376
  %v1378 = vadd.f32 %v1374, %v1377
  %vm1379 = vweird.f32 %v1343
  %vm1380 = vweird.f32 %v1374
  %vm1381 = vmor %vm1379, %vm1380
  %v1382 = vsel %vm1381, %v1374, %v1378
  %v1383 = vand.u32 2147483647, %v1343
  %vm1384 = vcmp.eq.f32.partialorder %v1383, 8.507059e+37
  %v1385 = vand.u32 %v1343, 2147483648
  %v1386 = vor.u32 1.1754944e-38, %v1385
  %v1387 = vsel %vm1384, %v1386, %v1382
  %v1388 = vmul.f32 1.0, %v1387
  %v1389 = vtanh.pop %v1331
  %v1390 = vmul.f32 %v1373, %v1166
  %v1391 = vmul.f32 %v1358, %v1389
  %v1392 = vadd.f32 %v1390, %v1391
  %v1393 = vtanh.pop %v1392
  %v1394 = vmul.f32 %v1388, %v1393
  %s1395 = sadd.s32 %s274, 4
  %v1396 = vstv %s1395
  %vm1397 = vcmp.lt.s32.totalorder %v1396, %v273
  %v1398 = vsel %vm1397, 1, 0
  %1399 = vset.pattern.permute.xlu0 0
  %1400 = vperm.xlu0 %1399, %v1398
  %v1401 = vpop.permute.xlu0 %1400
  %vm1402 = vcmp.eq.s32.totalorder %v1401, 1
  %v1403 = vsel %vm1402, %v1394, 0.0
  %1404 = vst [vmem:[%s5 + $0x20] sm:$0xff] %v1403
  %s1405 = scalar_lea.vmem [#allocation2], 160
  %v1406 = vld [vmem:[%s1405] sm:$0xff]
  %v1407 = vld [vmem:[%s1405 + $0x8] sm:$0xff]
  %v1408 = vld [vmem:[%s1405 + $0x10] sm:$0xff]
  %v1409 = vld [vmem:[%s1405 + $0x18] sm:$0xff]
  %v1410 = vld [vmem:[%s4] sm:$0xff]
  %v1411 = vld [vmem:[%s4 + $0x8] sm:$0xff]
  %v1412 = vld [vmem:[%s4 + $0x10] sm:$0xff]
  %v1413 = vld [vmem:[%s4 + $0x18] sm:$0xff]
  %v1414 = vld [vmem:[%s4 + $0x20] sm:$0xff]
  %v1415 = vld [vmem:[%s4 + $0x28] sm:$0xff]
  %v1416 = vld [vmem:[%s4 + $0x30] sm:$0xff]
  %v1417 = vld [vmem:[%s4 + $0x38] sm:$0xff]
  %v1418 = vld [vmem:[%s4 + $0x40] sm:$0xff]
  %v1419 = vld [vmem:[%s4 + $0x48] sm:$0xff]
  %v1420 = vld [vmem:[%s4 + $0x50] sm:$0xff]
  %v1421 = vld [vmem:[%s4 + $0x58] sm:$0xff]
  %v1422 = vld [vmem:[%s4 + $0x60] sm:$0xff]
  %v1423 = vld [vmem:[%s4 + $0x68] sm:$0xff]
  %v1424 = vld [vmem:[%s4 + $0x70] sm:$0xff]
  %v1425 = vld [vmem:[%s4 + $0x78] sm:$0xff]
  %v1426 = vld [vmem:[%s4 + $0x80] sm:$0xff]
  %v1427 = vld [vmem:[%s4 + $0x88] sm:$0xff]
  %v1428 = vld [vmem:[%s4 + $0x90] sm:$0xff]
  %v1429 = vld [vmem:[%s4 + $0x98] sm:$0xff]
  %v1430 = vld [vmem:[%s4 + $0xa0] sm:$0xff]
  %v1431 = vld [vmem:[%s4 + $0xa8] sm:$0xff]
  %v1432 = vld [vmem:[%s4 + $0xb0] sm:$0xff]
  %v1433 = vld [vmem:[%s4 + $0xb8] sm:$0xff]
  %v1434 = vld [vmem:[%s4 + $0xc0] sm:$0xff]
  %v1435 = vld [vmem:[%s4 + $0xc8] sm:$0xff]
  %v1436 = vld [vmem:[%s4 + $0xd0] sm:$0xff]
  %v1437 = vld [vmem:[%s4 + $0xd8] sm:$0xff]
  %v1438 = vld [vmem:[%s4 + $0xe0] sm:$0xff]
  %v1439 = vld [vmem:[%s4 + $0xe8] sm:$0xff]
  %v1440 = vld [vmem:[%s4 + $0xf0] sm:$0xff]
  %v1441 = vld [vmem:[%s4 + $0xf8] sm:$0xff]
  %v1442 = vld [vmem:[%s4 + $0x100] sm:$0xff]
  %v1443 = vld [vmem:[%s4 + $0x108] sm:$0xff]
  %v1444 = vld [vmem:[%s4 + $0x110] sm:$0xff]
  %v1445 = vld [vmem:[%s4 + $0x118] sm:$0xff]
  %v1446 = vld [vmem:[%s4 + $0x120] sm:$0xff]
  %v1447 = vld [vmem:[%s4 + $0x128] sm:$0xff]
  %v1448 = vld [vmem:[%s4 + $0x130] sm:$0xff]
  %v1449 = vld [vmem:[%s4 + $0x138] sm:$0xff]
  %v1450 = vld [vmem:[%s4 + $0x140] sm:$0xff]
  %v1451 = vld [vmem:[%s4 + $0x148] sm:$0xff]
  %v1452 = vld [vmem:[%s4 + $0x150] sm:$0xff]
  %v1453 = vld [vmem:[%s4 + $0x158] sm:$0xff]
  %v1454 = vld [vmem:[%s4 + $0x160] sm:$0xff]
  %v1455 = vld [vmem:[%s4 + $0x168] sm:$0xff]
  %v1456 = vld [vmem:[%s4 + $0x170] sm:$0xff]
  %v1457 = vld [vmem:[%s4 + $0x178] sm:$0xff]
  %v1458 = vld [vmem:[%s4 + $0x180] sm:$0xff]
  %v1459 = vld [vmem:[%s4 + $0x188] sm:$0xff]
  %v1460 = vld [vmem:[%s4 + $0x190] sm:$0xff]
  %v1461 = vld [vmem:[%s4 + $0x198] sm:$0xff]
  %v1462 = vld [vmem:[%s4 + $0x1a0] sm:$0xff]
  %v1463 = vld [vmem:[%s4 + $0x1a8] sm:$0xff]
  %v1464 = vld [vmem:[%s4 + $0x1b0] sm:$0xff]
  %v1465 = vld [vmem:[%s4 + $0x1b8] sm:$0xff]
  %v1466 = vld [vmem:[%s4 + $0x1c0] sm:$0xff]
  %v1467 = vld [vmem:[%s4 + $0x1c8] sm:$0xff]
  %v1468 = vld [vmem:[%s4 + $0x1d0] sm:$0xff]
  %v1469 = vld [vmem:[%s4 + $0x1d8] sm:$0xff]
  %v1470 = vld [vmem:[%s4 + $0x1e0] sm:$0xff]
  %v1471 = vld [vmem:[%s4 + $0x1e8] sm:$0xff]
  %v1472 = vld [vmem:[%s4 + $0x1f0] sm:$0xff]
  %v1473 = vld [vmem:[%s4 + $0x1f8] sm:$0xff]
  %1474 = vmatpush.msra.mxu0 %v1470
  %1475 = vmatpush.msra.mxu0 %v1466
  %1476 = vmatpush.msra.mxu0 %v1462
  %1477 = vmatpush.msra.mxu0 %v1458
  %1478 = vmatpush.msra.mxu0 %v1454
  %1479 = vmatpush.msra.mxu0 %v1450
  %1480 = vmatpush.msra.mxu0 %v1446
  %1481 = vmatpush.msra.mxu0 %v1442
  %1482 = vmatpush.msra.mxu0 %v1438
  %1483 = vmatpush.msra.mxu0 %v1434
  %1484 = vmatpush.msra.mxu0 %v1430
  %1485 = vmatpush.msra.mxu0 %v1426
  %1486 = vmatpush.msra.mxu0 %v1422
  %1487 = vmatpush.msra.mxu0 %v1418
  %1488 = vmatpush.msra.mxu0 %v1414
  %1489 = vmatpush.msra.mxu0 %v1410
  %1490 = vmatmul.f32.gmra.mxu0 %v1394
  %v1491 = vpop.f32.mrf.mxu0
  %v1492 = vadd.f32 0.0, %v1491
  %1493 = vdwg.mxu0
  %1494 = vmatpush.msra.mxu0 %v1471
  %1495 = vmatpush.msra.mxu0 %v1467
  %1496 = vmatpush.msra.mxu0 %v1463
  %1497 = vmatpush.msra.mxu0 %v1459
  %1498 = vmatpush.msra.mxu0 %v1455
  %1499 = vmatpush.msra.mxu0 %v1451
  %1500 = vmatpush.msra.mxu0 %v1447
  %1501 = vmatpush.msra.mxu0 %v1443
  %1502 = vmatpush.msra.mxu0 %v1439
  %1503 = vmatpush.msra.mxu0 %v1435
  %1504 = vmatpush.msra.mxu0 %v1431
  %1505 = vmatpush.msra.mxu0 %v1427
  %1506 = vmatpush.msra.mxu0 %v1423
  %1507 = vmatpush.msra.mxu0 %v1419
  %1508 = vmatpush.msra.mxu0 %v1415
  %1509 = vmatpush.msra.mxu0 %v1411
  %1510 = vmatmul.f32.gmra.mxu0 %v1394
  %v1511 = vpop.f32.mrf.mxu0
  %v1512 = vadd.f32 0.0, %v1511
  %1513 = vdwg.mxu0
  %1514 = vmatpush.msra.mxu0 %v1472
  %1515 = vmatpush.msra.mxu0 %v1468
  %1516 = vmatpush.msra.mxu0 %v1464
  %1517 = vmatpush.msra.mxu0 %v1460
  %1518 = vmatpush.msra.mxu0 %v1456
  %1519 = vmatpush.msra.mxu0 %v1452
  %1520 = vmatpush.msra.mxu0 %v1448
  %1521 = vmatpush.msra.mxu0 %v1444
  %1522 = vmatpush.msra.mxu0 %v1440
  %1523 = vmatpush.msra.mxu0 %v1436
  %1524 = vmatpush.msra.mxu0 %v1432
  %1525 = vmatpush.msra.mxu0 %v1428
  %1526 = vmatpush.msra.mxu0 %v1424
  %1527 = vmatpush.msra.mxu0 %v1420
  %1528 = vmatpush.msra.mxu0 %v1416
  %1529 = vmatpush.msra.mxu0 %v1412
  %1530 = vmatmul.f32.gmra.mxu0 %v1394
  %v1531 = vpop.f32.mrf.mxu0
  %v1532 = vadd.f32 0.0, %v1531
  %1533 = vdwg.mxu0
  %1534 = vmatpush.msra.mxu0 %v1473
  %1535 = vmatpush.msra.mxu0 %v1469
  %1536 = vmatpush.msra.mxu0 %v1465
  %1537 = vmatpush.msra.mxu0 %v1461
  %1538 = vmatpush.msra.mxu0 %v1457
  %1539 = vmatpush.msra.mxu0 %v1453
  %1540 = vmatpush.msra.mxu0 %v1449
  %1541 = vmatpush.msra.mxu0 %v1445
  %1542 = vmatpush.msra.mxu0 %v1441
  %1543 = vmatpush.msra.mxu0 %v1437
  %1544 = vmatpush.msra.mxu0 %v1433
  %1545 = vmatpush.msra.mxu0 %v1429
  %1546 = vmatpush.msra.mxu0 %v1425
  %1547 = vmatpush.msra.mxu0 %v1421
  %1548 = vmatpush.msra.mxu0 %v1417
  %1549 = vmatpush.msra.mxu0 %v1413
  %1550 = vmatmul.f32.gmra.mxu0 %v1394
  %v1551 = vpop.f32.mrf.mxu0
  %v1552 = vadd.f32 0.0, %v1551
  %1553 = vdwg.mxu0
  %v1554 = vadd.f32 %v1406, %v1492
  %v1555 = vadd.f32 %v1407, %v1512
  %v1556 = vadd.f32 %v1408, %v1532
  %v1557 = vadd.f32 %v1409, %v1552
  %v1558 = vxor.u32 %v1554, 2147483648
  %v1559 = vxor.u32 %v1555, 2147483648
  %v1560 = vxor.u32 %v1556, 2147483648
  %v1561 = vmul.f32 %v1558, 1.442695
  %v1562 = vpow.pop %v1561
  %v1563 = vmul.f32 %v1559, 1.442695
  %v1564 = vpow.pop %v1563
  %v1565 = vmul.f32 %v1560, 1.442695
  %v1566 = vpow.pop %v1565
  %v1567 = vadd.f32 %v1562, 1.0
  %v1568 = vadd.f32 %v1564, 1.0
  %v1569 = vadd.f32 %v1566, 1.0
  %v1570 = vrcp.pop %v1567
  %v1571 = vmul.f32 %v1567, %v1570
  %v1572 = vsub.f32 1.0, %v1571
  %v1573 = vmul.f32 %v1570, %v1572
  %v1574 = vadd.f32 %v1570, %v1573
  %vm1575 = vweird.f32 %v1567
  %vm1576 = vweird.f32 %v1570
  %vm1577 = vmor %vm1575, %vm1576
  %v1578 = vsel %vm1577, %v1570, %v1574
  %v1579 = vand.u32 2147483647, %v1567
  %vm1580 = vcmp.eq.f32.partialorder %v1579, 8.507059e+37
  %v1581 = vand.u32 %v1567, 2147483648
  %v1582 = vor.u32 1.1754944e-38, %v1581
  %v1583 = vsel %vm1580, %v1582, %v1578
  %v1584 = vmul.f32 1.0, %v1583
  %v1585 = vrcp.pop %v1568
  %v1586 = vmul.f32 %v1568, %v1585
  %v1587 = vsub.f32 1.0, %v1586
  %v1588 = vmul.f32 %v1585, %v1587
  %v1589 = vadd.f32 %v1585, %v1588
  %vm1590 = vweird.f32 %v1568
  %vm1591 = vweird.f32 %v1585
  %vm1592 = vmor %vm1590, %vm1591
  %v1593 = vsel %vm1592, %v1585, %v1589
  %v1594 = vand.u32 2147483647, %v1568
  %vm1595 = vcmp.eq.f32.partialorder %v1594, 8.507059e+37
  %v1596 = vand.u32 %v1568, 2147483648
  %v1597 = vor.u32 1.1754944e-38, %v1596
  %v1598 = vsel %vm1595, %v1597, %v1593
  %v1599 = vmul.f32 1.0, %v1598
  %v1600 = vrcp.pop %v1569
  %v1601 = vmul.f32 %v1569, %v1600
  %v1602 = vsub.f32 1.0, %v1601
  %v1603 = vmul.f32 %v1600, %v1602
  %v1604 = vadd.f32 %v1600, %v1603
  %vm1605 = vweird.f32 %v1569
  %vm1606 = vweird.f32 %v1600
  %vm1607 = vmor %vm1605, %vm1606
  %v1608 = vsel %vm1607, %v1600, %v1604
  %v1609 = vand.u32 2147483647, %v1569
  %vm1610 = vcmp.eq.f32.partialorder %v1609, 8.507059e+37
  %v1611 = vand.u32 %v1569, 2147483648
  %v1612 = vor.u32 1.1754944e-38, %v1611
  %v1613 = vsel %vm1610, %v1612, %v1608
  %v1614 = vmul.f32 1.0, %v1613
  %v1615 = vtanh.pop %v1557
  %v1616 = vmul.f32 %v1599, %v1392
  %v1617 = vmul.f32 %v1584, %v1615
  %v1618 = vadd.f32 %v1616, %v1617
  %v1619 = vtanh.pop %v1618
  %v1620 = vmul.f32 %v1614, %v1619
  %s1621 = sadd.s32 %s274, 5
  %v1622 = vstv %s1621
  %vm1623 = vcmp.lt.s32.totalorder %v1622, %v273
  %v1624 = vsel %vm1623, 1, 0
  %1625 = vset.pattern.permute.xlu0 0
  %1626 = vperm.xlu0 %1625, %v1624
  %v1627 = vpop.permute.xlu0 %1626
  %vm1628 = vcmp.eq.s32.totalorder %v1627, 1
  %v1629 = vsel %vm1628, %v1620, 0.0
  %1630 = vst [vmem:[%s5 + $0x28] sm:$0xff] %v1629
  %s1631 = scalar_lea.vmem [#allocation2], 192
  %v1632 = vld [vmem:[%s1631] sm:$0xff]
  %v1633 = vld [vmem:[%s1631 + $0x8] sm:$0xff]
  %v1634 = vld [vmem:[%s1631 + $0x10] sm:$0xff]
  %v1635 = vld [vmem:[%s1631 + $0x18] sm:$0xff]
  %v1636 = vld [vmem:[%s4] sm:$0xff]
  %v1637 = vld [vmem:[%s4 + $0x8] sm:$0xff]
  %v1638 = vld [vmem:[%s4 + $0x10] sm:$0xff]
  %v1639 = vld [vmem:[%s4 + $0x18] sm:$0xff]
  %v1640 = vld [vmem:[%s4 + $0x20] sm:$0xff]
  %v1641 = vld [vmem:[%s4 + $0x28] sm:$0xff]
  %v1642 = vld [vmem:[%s4 + $0x30] sm:$0xff]
  %v1643 = vld [vmem:[%s4 + $0x38] sm:$0xff]
  %v1644 = vld [vmem:[%s4 + $0x40] sm:$0xff]
  %v1645 = vld [vmem:[%s4 + $0x48] sm:$0xff]
  %v1646 = vld [vmem:[%s4 + $0x50] sm:$0xff]
  %v1647 = vld [vmem:[%s4 + $0x58] sm:$0xff]
  %v1648 = vld [vmem:[%s4 + $0x60] sm:$0xff]
  %v1649 = vld [vmem:[%s4 + $0x68] sm:$0xff]
  %v1650 = vld [vmem:[%s4 + $0x70] sm:$0xff]
  %v1651 = vld [vmem:[%s4 + $0x78] sm:$0xff]
  %v1652 = vld [vmem:[%s4 + $0x80] sm:$0xff]
  %v1653 = vld [vmem:[%s4 + $0x88] sm:$0xff]
  %v1654 = vld [vmem:[%s4 + $0x90] sm:$0xff]
  %v1655 = vld [vmem:[%s4 + $0x98] sm:$0xff]
  %v1656 = vld [vmem:[%s4 + $0xa0] sm:$0xff]
  %v1657 = vld [vmem:[%s4 + $0xa8] sm:$0xff]
  %v1658 = vld [vmem:[%s4 + $0xb0] sm:$0xff]
  %v1659 = vld [vmem:[%s4 + $0xb8] sm:$0xff]
  %v1660 = vld [vmem:[%s4 + $0xc0] sm:$0xff]
  %v1661 = vld [vmem:[%s4 + $0xc8] sm:$0xff]
  %v1662 = vld [vmem:[%s4 + $0xd0] sm:$0xff]
  %v1663 = vld [vmem:[%s4 + $0xd8] sm:$0xff]
  %v1664 = vld [vmem:[%s4 + $0xe0] sm:$0xff]
  %v1665 = vld [vmem:[%s4 + $0xe8] sm:$0xff]
  %v1666 = vld [vmem:[%s4 + $0xf0] sm:$0xff]
  %v1667 = vld [vmem:[%s4 + $0xf8] sm:$0xff]
  %v1668 = vld [vmem:[%s4 + $0x100] sm:$0xff]
  %v1669 = vld [vmem:[%s4 + $0x108] sm:$0xff]
  %v1670 = vld [vmem:[%s4 + $0x110] sm:$0xff]
  %v1671 = vld [vmem:[%s4 + $0x118] sm:$0xff]
  %v1672 = vld [vmem:[%s4 + $0x120] sm:$0xff]
  %v1673 = vld [vmem:[%s4 + $0x128] sm:$0xff]
  %v1674 = vld [vmem:[%s4 + $0x130] sm:$0xff]
  %v1675 = vld [vmem:[%s4 + $0x138] sm:$0xff]
  %v1676 = vld [vmem:[%s4 + $0x140] sm:$0xff]
  %v1677 = vld [vmem:[%s4 + $0x148] sm:$0xff]
  %v1678 = vld [vmem:[%s4 + $0x150] sm:$0xff]
  %v1679 = vld [vmem:[%s4 + $0x158] sm:$0xff]
  %v1680 = vld [vmem:[%s4 + $0x160] sm:$0xff]
  %v1681 = vld [vmem:[%s4 + $0x168] sm:$0xff]
  %v1682 = vld [vmem:[%s4 + $0x170] sm:$0xff]
  %v1683 = vld [vmem:[%s4 + $0x178] sm:$0xff]
  %v1684 = vld [vmem:[%s4 + $0x180] sm:$0xff]
  %v1685 = vld [vmem:[%s4 + $0x188] sm:$0xff]
  %v1686 = vld [vmem:[%s4 + $0x190] sm:$0xff]
  %v1687 = vld [vmem:[%s4 + $0x198] sm:$0xff]
  %v1688 = vld [vmem:[%s4 + $0x1a0] sm:$0xff]
  %v1689 = vld [vmem:[%s4 + $0x1a8] sm:$0xff]
  %v1690 = vld [vmem:[%s4 + $0x1b0] sm:$0xff]
  %v1691 = vld [vmem:[%s4 + $0x1b8] sm:$0xff]
  %v1692 = vld [vmem:[%s4 + $0x1c0] sm:$0xff]
  %v1693 = vld [vmem:[%s4 + $0x1c8] sm:$0xff]
  %v1694 = vld [vmem:[%s4 + $0x1d0] sm:$0xff]
  %v1695 = vld [vmem:[%s4 + $0x1d8] sm:$0xff]
  %v1696 = vld [vmem:[%s4 + $0x1e0] sm:$0xff]
  %v1697 = vld [vmem:[%s4 + $0x1e8] sm:$0xff]
  %v1698 = vld [vmem:[%s4 + $0x1f0] sm:$0xff]
  %v1699 = vld [vmem:[%s4 + $0x1f8] sm:$0xff]
  %1700 = vmatpush.msra.mxu0 %v1696
  %1701 = vmatpush.msra.mxu0 %v1692
  %1702 = vmatpush.msra.mxu0 %v1688
  %1703 = vmatpush.msra.mxu0 %v1684
  %1704 = vmatpush.msra.mxu0 %v1680
  %1705 = vmatpush.msra.mxu0 %v1676
  %1706 = vmatpush.msra.mxu0 %v1672
  %1707 = vmatpush.msra.mxu0 %v1668
  %1708 = vmatpush.msra.mxu0 %v1664
  %1709 = vmatpush.msra.mxu0 %v1660
  %1710 = vmatpush.msra.mxu0 %v1656
  %1711 = vmatpush.msra.mxu0 %v1652
  %1712 = vmatpush.msra.mxu0 %v1648
  %1713 = vmatpush.msra.mxu0 %v1644
  %1714 = vmatpush.msra.mxu0 %v1640
  %1715 = vmatpush.msra.mxu0 %v1636
  %1716 = vmatmul.f32.gmra.mxu0 %v1620
  %v1717 = vpop.f32.mrf.mxu0
  %v1718 = vadd.f32 0.0, %v1717
  %1719 = vdwg.mxu0
  %1720 = vmatpush.msra.mxu0 %v1697
  %1721 = vmatpush.msra.mxu0 %v1693
  %1722 = vmatpush.msra.mxu0 %v1689
  %1723 = vmatpush.msra.mxu0 %v1685
  %1724 = vmatpush.msra.mxu0 %v1681
  %1725 = vmatpush.msra.mxu0 %v1677
  %1726 = vmatpush.msra.mxu0 %v1673
  %1727 = vmatpush.msra.mxu0 %v1669
  %1728 = vmatpush.msra.mxu0 %v1665
  %1729 = vmatpush.msra.mxu0 %v1661
  %1730 = vmatpush.msra.mxu0 %v1657
  %1731 = vmatpush.msra.mxu0 %v1653
  %1732 = vmatpush.msra.mxu0 %v1649
  %1733 = vmatpush.msra.mxu0 %v1645
  %1734 = vmatpush.msra.mxu0 %v1641
  %1735 = vmatpush.msra.mxu0 %v1637
  %1736 = vmatmul.f32.gmra.mxu0 %v1620
  %v1737 = vpop.f32.mrf.mxu0
  %v1738 = vadd.f32 0.0, %v1737
  %1739 = vdwg.mxu0
  %1740 = vmatpush.msra.mxu0 %v1698
  %1741 = vmatpush.msra.mxu0 %v1694
  %1742 = vmatpush.msra.mxu0 %v1690
  %1743 = vmatpush.msra.mxu0 %v1686
  %1744 = vmatpush.msra.mxu0 %v1682
  %1745 = vmatpush.msra.mxu0 %v1678
  %1746 = vmatpush.msra.mxu0 %v1674
  %1747 = vmatpush.msra.mxu0 %v1670
  %1748 = vmatpush.msra.mxu0 %v1666
  %1749 = vmatpush.msra.mxu0 %v1662
  %1750 = vmatpush.msra.mxu0 %v1658
  %1751 = vmatpush.msra.mxu0 %v1654
  %1752 = vmatpush.msra.mxu0 %v1650
  %1753 = vmatpush.msra.mxu0 %v1646
  %1754 = vmatpush.msra.mxu0 %v1642
  %1755 = vmatpush.msra.mxu0 %v1638
  %1756 = vmatmul.f32.gmra.mxu0 %v1620
  %v1757 = vpop.f32.mrf.mxu0
  %v1758 = vadd.f32 0.0, %v1757
  %1759 = vdwg.mxu0
  %1760 = vmatpush.msra.mxu0 %v1699
  %1761 = vmatpush.msra.mxu0 %v1695
  %1762 = vmatpush.msra.mxu0 %v1691
  %1763 = vmatpush.msra.mxu0 %v1687
  %1764 = vmatpush.msra.mxu0 %v1683
  %1765 = vmatpush.msra.mxu0 %v1679
  %1766 = vmatpush.msra.mxu0 %v1675
  %1767 = vmatpush.msra.mxu0 %v1671
  %1768 = vmatpush.msra.mxu0 %v1667
  %1769 = vmatpush.msra.mxu0 %v1663
  %1770 = vmatpush.msra.mxu0 %v1659
  %1771 = vmatpush.msra.mxu0 %v1655
  %1772 = vmatpush.msra.mxu0 %v1651
  %1773 = vmatpush.msra.mxu0 %v1647
  %1774 = vmatpush.msra.mxu0 %v1643
  %1775 = vmatpush.msra.mxu0 %v1639
  %1776 = vmatmul.f32.gmra.mxu0 %v1620
  %v1777 = vpop.f32.mrf.mxu0
  %v1778 = vadd.f32 0.0, %v1777
  %1779 = vdwg.mxu0
  %v1780 = vadd.f32 %v1632, %v1718
  %v1781 = vadd.f32 %v1633, %v1738
  %v1782 = vadd.f32 %v1634, %v1758
  %v1783 = vadd.f32 %v1635, %v1778
  %v1784 = vxor.u32 %v1780, 2147483648
  %v1785 = vxor.u32 %v1781, 2147483648
  %v1786 = vxor.u32 %v1782, 2147483648
  %v1787 = vmul.f32 %v1784, 1.442695
  %v1788 = vpow.pop %v1787
  %v1789 = vmul.f32 %v1785, 1.442695
  %v1790 = vpow.pop %v1789
  %v1791 = vmul.f32 %v1786, 1.442695
  %v1792 = vpow.pop %v1791
  %v1793 = vadd.f32 %v1788, 1.0
  %v1794 = vadd.f32 %v1790, 1.0
  %v1795 = vadd.f32 %v1792, 1.0
  %v1796 = vrcp.pop %v1793
  %v1797 = vmul.f32 %v1793, %v1796
  %v1798 = vsub.f32 1.0, %v1797
  %v1799 = vmul.f32 %v1796, %v1798
  %v1800 = vadd.f32 %v1796, %v1799
  %vm1801 = vweird.f32 %v1793
  %vm1802 = vweird.f32 %v1796
  %vm1803 = vmor %vm1801, %vm1802
  %v1804 = vsel %vm1803, %v1796, %v1800
  %v1805 = vand.u32 2147483647, %v1793
  %vm1806 = vcmp.eq.f32.partialorder %v1805, 8.507059e+37
  %v1807 = vand.u32 %v1793, 2147483648
  %v1808 = vor.u32 1.1754944e-38, %v1807
  %v1809 = vsel %vm1806, %v1808, %v1804
  %v1810 = vmul.f32 1.0, %v1809
  %v1811 = vrcp.pop %v1794
  %v1812 = vmul.f32 %v1794, %v1811
  %v1813 = vsub.f32 1.0, %v1812
  %v1814 = vmul.f32 %v1811, %v1813
  %v1815 = vadd.f32 %v1811, %v1814
  %vm1816 = vweird.f32 %v1794
  %vm1817 = vweird.f32 %v1811
  %vm1818 = vmor %vm1816, %vm1817
  %v1819 = vsel %vm1818, %v1811, %v1815
  %v1820 = vand.u32 2147483647, %v1794
  %vm1821 = vcmp.eq.f32.partialorder %v1820, 8.507059e+37
  %v1822 = vand.u32 %v1794, 2147483648
  %v1823 = vor.u32 1.1754944e-38, %v1822
  %v1824 = vsel %vm1821, %v1823, %v1819
  %v1825 = vmul.f32 1.0, %v1824
  %v1826 = vrcp.pop %v1795
  %v1827 = vmul.f32 %v1795, %v1826
  %v1828 = vsub.f32 1.0, %v1827
  %v1829 = vmul.f32 %v1826, %v1828
  %v1830 = vadd.f32 %v1826, %v1829
  %vm1831 = vweird.f32 %v1795
  %vm1832 = vweird.f32 %v1826
  %vm1833 = vmor %vm1831, %vm1832
  %v1834 = vsel %vm1833, %v1826, %v1830
  %v1835 = vand.u32 2147483647, %v1795
  %vm1836 = vcmp.eq.f32.partialorder %v1835, 8.507059e+37
  %v1837 = vand.u32 %v1795, 2147483648
  %v1838 = vor.u32 1.1754944e-38, %v1837
  %v1839 = vsel %vm1836, %v1838, %v1834
  %v1840 = vmul.f32 1.0, %v1839
  %v1841 = vtanh.pop %v1783
  %v1842 = vmul.f32 %v1825, %v1618
  %v1843 = vmul.f32 %v1810, %v1841
  %v1844 = vadd.f32 %v1842, %v1843
  %v1845 = vtanh.pop %v1844
  %v1846 = vmul.f32 %v1840, %v1845
  %s1847 = sadd.s32 %s274, 6
  %v1848 = vstv %s1847
  %vm1849 = vcmp.lt.s32.totalorder %v1848, %v273
  %v1850 = vsel %vm1849, 1, 0
  %1851 = vset.pattern.permute.xlu0 0
  %1852 = vperm.xlu0 %1851, %v1850
  %v1853 = vpop.permute.xlu0 %1852
  %vm1854 = vcmp.eq.s32.totalorder %v1853, 1
  %v1855 = vsel %vm1854, %v1846, 0.0
  %1856 = vst [vmem:[%s5 + $0x30] sm:$0xff] %v1855
  %s1857 = scalar_lea.vmem [#allocation2], 224
  %v1858 = vld [vmem:[%s1857] sm:$0xff]
  %v1859 = vld [vmem:[%s1857 + $0x8] sm:$0xff]
  %v1860 = vld [vmem:[%s1857 + $0x10] sm:$0xff]
  %v1861 = vld [vmem:[%s1857 + $0x18] sm:$0xff]
  %v1862 = vld [vmem:[%s4] sm:$0xff]
  %v1863 = vld [vmem:[%s4 + $0x8] sm:$0xff]
  %v1864 = vld [vmem:[%s4 + $0x10] sm:$0xff]
  %v1865 = vld [vmem:[%s4 + $0x18] sm:$0xff]
  %v1866 = vld [vmem:[%s4 + $0x20] sm:$0xff]
  %v1867 = vld [vmem:[%s4 + $0x28] sm:$0xff]
  %v1868 = vld [vmem:[%s4 + $0x30] sm:$0xff]
  %v1869 = vld [vmem:[%s4 + $0x38] sm:$0xff]
  %v1870 = vld [vmem:[%s4 + $0x40] sm:$0xff]
  %v1871 = vld [vmem:[%s4 + $0x48] sm:$0xff]
  %v1872 = vld [vmem:[%s4 + $0x50] sm:$0xff]
  %v1873 = vld [vmem:[%s4 + $0x58] sm:$0xff]
  %v1874 = vld [vmem:[%s4 + $0x60] sm:$0xff]
  %v1875 = vld [vmem:[%s4 + $0x68] sm:$0xff]
  %v1876 = vld [vmem:[%s4 + $0x70] sm:$0xff]
  %v1877 = vld [vmem:[%s4 + $0x78] sm:$0xff]
  %v1878 = vld [vmem:[%s4 + $0x80] sm:$0xff]
  %v1879 = vld [vmem:[%s4 + $0x88] sm:$0xff]
  %v1880 = vld [vmem:[%s4 + $0x90] sm:$0xff]
  %v1881 = vld [vmem:[%s4 + $0x98] sm:$0xff]
  %v1882 = vld [vmem:[%s4 + $0xa0] sm:$0xff]
  %v1883 = vld [vmem:[%s4 + $0xa8] sm:$0xff]
  %v1884 = vld [vmem:[%s4 + $0xb0] sm:$0xff]
  %v1885 = vld [vmem:[%s4 + $0xb8] sm:$0xff]
  %v1886 = vld [vmem:[%s4 + $0xc0] sm:$0xff]
  %v1887 = vld [vmem:[%s4 + $0xc8] sm:$0xff]
  %v1888 = vld [vmem:[%s4 + $0xd0] sm:$0xff]
  %v1889 = vld [vmem:[%s4 + $0xd8] sm:$0xff]
  %v1890 = vld [vmem:[%s4 + $0xe0] sm:$0xff]
  %v1891 = vld [vmem:[%s4 + $0xe8] sm:$0xff]
  %v1892 = vld [vmem:[%s4 + $0xf0] sm:$0xff]
  %v1893 = vld [vmem:[%s4 + $0xf8] sm:$0xff]
  %v1894 = vld [vmem:[%s4 + $0x100] sm:$0xff]
  %v1895 = vld [vmem:[%s4 + $0x108] sm:$0xff]
  %v1896 = vld [vmem:[%s4 + $0x110] sm:$0xff]
  %v1897 = vld [vmem:[%s4 + $0x118] sm:$0xff]
  %v1898 = vld [vmem:[%s4 + $0x120] sm:$0xff]
  %v1899 = vld [vmem:[%s4 + $0x128] sm:$0xff]
  %v1900 = vld [vmem:[%s4 + $0x130] sm:$0xff]
  %v1901 = vld [vmem:[%s4 + $0x138] sm:$0xff]
  %v1902 = vld [vmem:[%s4 + $0x140] sm:$0xff]
  %v1903 = vld [vmem:[%s4 + $0x148] sm:$0xff]
  %v1904 = vld [vmem:[%s4 + $0x150] sm:$0xff]
  %v1905 = vld [vmem:[%s4 + $0x158] sm:$0xff]
  %v1906 = vld [vmem:[%s4 + $0x160] sm:$0xff]
  %v1907 = vld [vmem:[%s4 + $0x168] sm:$0xff]
  %v1908 = vld [vmem:[%s4 + $0x170] sm:$0xff]
  %v1909 = vld [vmem:[%s4 + $0x178] sm:$0xff]
  %v1910 = vld [vmem:[%s4 + $0x180] sm:$0xff]
  %v1911 = vld [vmem:[%s4 + $0x188] sm:$0xff]
  %v1912 = vld [vmem:[%s4 + $0x190] sm:$0xff]
  %v1913 = vld [vmem:[%s4 + $0x198] sm:$0xff]
  %v1914 = vld [vmem:[%s4 + $0x1a0] sm:$0xff]
  %v1915 = vld [vmem:[%s4 + $0x1a8] sm:$0xff]
  %v1916 = vld [vmem:[%s4 + $0x1b0] sm:$0xff]
  %v1917 = vld [vmem:[%s4 + $0x1b8] sm:$0xff]
  %v1918 = vld [vmem:[%s4 + $0x1c0] sm:$0xff]
  %v1919 = vld [vmem:[%s4 + $0x1c8] sm:$0xff]
  %v1920 = vld [vmem:[%s4 + $0x1d0] sm:$0xff]
  %v1921 = vld [vmem:[%s4 + $0x1d8] sm:$0xff]
  %v1922 = vld [vmem:[%s4 + $0x1e0] sm:$0xff]
  %v1923 = vld [vmem:[%s4 + $0x1e8] sm:$0xff]
  %v1924 = vld [vmem:[%s4 + $0x1f0] sm:$0xff]
  %v1925 = vld [vmem:[%s4 + $0x1f8] sm:$0xff]
  %1926 = vmatpush.msra.mxu0 %v1922
  %1927 = vmatpush.msra.mxu0 %v1918
  %1928 = vmatpush.msra.mxu0 %v1914
  %1929 = vmatpush.msra.mxu0 %v1910
  %1930 = vmatpush.msra.mxu0 %v1906
  %1931 = vmatpush.msra.mxu0 %v1902
  %1932 = vmatpush.msra.mxu0 %v1898
  %1933 = vmatpush.msra.mxu0 %v1894
  %1934 = vmatpush.msra.mxu0 %v1890
  %1935 = vmatpush.msra.mxu0 %v1886
  %1936 = vmatpush.msra.mxu0 %v1882
  %1937 = vmatpush.msra.mxu0 %v1878
  %1938 = vmatpush.msra.mxu0 %v1874
  %1939 = vmatpush.msra.mxu0 %v1870
  %1940 = vmatpush.msra.mxu0 %v1866
  %1941 = vmatpush.msra.mxu0 %v1862
  %1942 = vmatmul.f32.gmra.mxu0 %v1846
  %v1943 = vpop.f32.mrf.mxu0
  %v1944 = vadd.f32 0.0, %v1943
  %1945 = vdwg.mxu0
  %1946 = vmatpush.msra.mxu0 %v1923
  %1947 = vmatpush.msra.mxu0 %v1919
  %1948 = vmatpush.msra.mxu0 %v1915
  %1949 = vmatpush.msra.mxu0 %v1911
  %1950 = vmatpush.msra.mxu0 %v1907
  %1951 = vmatpush.msra.mxu0 %v1903
  %1952 = vmatpush.msra.mxu0 %v1899
  %1953 = vmatpush.msra.mxu0 %v1895
  %1954 = vmatpush.msra.mxu0 %v1891
  %1955 = vmatpush.msra.mxu0 %v1887
  %1956 = vmatpush.msra.mxu0 %v1883
  %1957 = vmatpush.msra.mxu0 %v1879
  %1958 = vmatpush.msra.mxu0 %v1875
  %1959 = vmatpush.msra.mxu0 %v1871
  %1960 = vmatpush.msra.mxu0 %v1867
  %1961 = vmatpush.msra.mxu0 %v1863
  %1962 = vmatmul.f32.gmra.mxu0 %v1846
  %v1963 = vpop.f32.mrf.mxu0
  %v1964 = vadd.f32 0.0, %v1963
  %1965 = vdwg.mxu0
  %1966 = vmatpush.msra.mxu0 %v1924
  %1967 = vmatpush.msra.mxu0 %v1920
  %1968 = vmatpush.msra.mxu0 %v1916
  %1969 = vmatpush.msra.mxu0 %v1912
  %1970 = vmatpush.msra.mxu0 %v1908
  %1971 = vmatpush.msra.mxu0 %v1904
  %1972 = vmatpush.msra.mxu0 %v1900
  %1973 = vmatpush.msra.mxu0 %v1896
  %1974 = vmatpush.msra.mxu0 %v1892
  %1975 = vmatpush.msra.mxu0 %v1888
  %1976 = vmatpush.msra.mxu0 %v1884
  %1977 = vmatpush.msra.mxu0 %v1880
  %1978 = vmatpush.msra.mxu0 %v1876
  %1979 = vmatpush.msra.mxu0 %v1872
  %1980 = vmatpush.msra.mxu0 %v1868
  %1981 = vmatpush.msra.mxu0 %v1864
  %1982 = vmatmul.f32.gmra.mxu0 %v1846
  %v1983 = vpop.f32.mrf.mxu0
  %v1984 = vadd.f32 0.0, %v1983
  %1985 = vdwg.mxu0
  %1986 = vmatpush.msra.mxu0 %v1925
  %1987 = vmatpush.msra.mxu0 %v1921
  %1988 = vmatpush.msra.mxu0 %v1917
  %1989 = vmatpush.msra.mxu0 %v1913
  %1990 = vmatpush.msra.mxu0 %v1909
  %1991 = vmatpush.msra.mxu0 %v1905
  %1992 = vmatpush.msra.mxu0 %v1901
  %1993 = vmatpush.msra.mxu0 %v1897
  %1994 = vmatpush.msra.mxu0 %v1893
  %1995 = vmatpush.msra.mxu0 %v1889
  %1996 = vmatpush.msra.mxu0 %v1885
  %1997 = vmatpush.msra.mxu0 %v1881
  %1998 = vmatpush.msra.mxu0 %v1877
  %1999 = vmatpush.msra.mxu0 %v1873
  %2000 = vmatpush.msra.mxu0 %v1869
  %2001 = vmatpush.msra.mxu0 %v1865
  %2002 = vmatmul.f32.gmra.mxu0 %v1846
  %v2003 = vpop.f32.mrf.mxu0
  %v2004 = vadd.f32 0.0, %v2003
  %2005 = vdwg.mxu0
  %v2006 = vadd.f32 %v1858, %v1944
  %v2007 = vadd.f32 %v1859, %v1964
  %v2008 = vadd.f32 %v1860, %v1984
  %v2009 = vadd.f32 %v1861, %v2004
  %v2010 = vxor.u32 %v2006, 2147483648
  %v2011 = vxor.u32 %v2007, 2147483648
  %v2012 = vxor.u32 %v2008, 2147483648
  %v2013 = vmul.f32 %v2010, 1.442695
  %v2014 = vpow.pop %v2013
  %v2015 = vmul.f32 %v2011, 1.442695
  %v2016 = vpow.pop %v2015
  %v2017 = vmul.f32 %v2012, 1.442695
  %v2018 = vpow.pop %v2017
  %v2019 = vadd.f32 %v2014, 1.0
  %v2020 = vadd.f32 %v2016, 1.0
  %v2021 = vadd.f32 %v2018, 1.0
  %v2022 = vrcp.pop %v2019
  %v2023 = vmul.f32 %v2019, %v2022
  %v2024 = vsub.f32 1.0, %v2023
  %v2025 = vmul.f32 %v2022, %v2024
  %v2026 = vadd.f32 %v2022, %v2025
  %vm2027 = vweird.f32 %v2019
  %vm2028 = vweird.f32 %v2022
  %vm2029 = vmor %vm2027, %vm2028
  %v2030 = vsel %vm2029, %v2022, %v2026
  %v2031 = vand.u32 2147483647, %v2019
  %vm2032 = vcmp.eq.f32.partialorder %v2031, 8.507059e+37
  %v2033 = vand.u32 %v2019, 2147483648
  %v2034 = vor.u32 1.1754944e-38, %v2033
  %v2035 = vsel %vm2032, %v2034, %v2030
  %v2036 = vmul.f32 1.0, %v2035
  %v2037 = vrcp.pop %v2020
  %v2038 = vmul.f32 %v2020, %v2037
  %v2039 = vsub.f32 1.0, %v2038
  %v2040 = vmul.f32 %v2037, %v2039
  %v2041 = vadd.f32 %v2037, %v2040
  %vm2042 = vweird.f32 %v2020
  %vm2043 = vweird.f32 %v2037
  %vm2044 = vmor %vm2042, %vm2043
  %v2045 = vsel %vm2044, %v2037, %v2041
  %v2046 = vand.u32 2147483647, %v2020
  %vm2047 = vcmp.eq.f32.partialorder %v2046, 8.507059e+37
  %v2048 = vand.u32 %v2020, 2147483648
  %v2049 = vor.u32 1.1754944e-38, %v2048
  %v2050 = vsel %vm2047, %v2049, %v2045
  %v2051 = vmul.f32 1.0, %v2050
  %v2052 = vrcp.pop %v2021
  %v2053 = vmul.f32 %v2021, %v2052
  %v2054 = vsub.f32 1.0, %v2053
  %v2055 = vmul.f32 %v2052, %v2054
  %v2056 = vadd.f32 %v2052, %v2055
  %vm2057 = vweird.f32 %v2021
  %vm2058 = vweird.f32 %v2052
  %vm2059 = vmor %vm2057, %vm2058
  %v2060 = vsel %vm2059, %v2052, %v2056
  %v2061 = vand.u32 2147483647, %v2021
  %vm2062 = vcmp.eq.f32.partialorder %v2061, 8.507059e+37
  %v2063 = vand.u32 %v2021, 2147483648
  %v2064 = vor.u32 1.1754944e-38, %v2063
  %v2065 = vsel %vm2062, %v2064, %v2060
  %v2066 = vmul.f32 1.0, %v2065
  %v2067 = vtanh.pop %v2009
  %v2068 = vmul.f32 %v2051, %v1844
  %v2069 = vmul.f32 %v2036, %v2067
  %v2070 = vadd.f32 %v2068, %v2069
  %v2071 = vtanh.pop %v2070
  %v2072 = vmul.f32 %v2066, %v2071
  %s2073 = sadd.s32 %s274, 7
  %v2074 = vstv %s2073
  %vm2075 = vcmp.lt.s32.totalorder %v2074, %v273
  %v2076 = vsel %vm2075, 1, 0
  %2077 = vset.pattern.permute.xlu0 0
  %2078 = vperm.xlu0 %2077, %v2076
  %v2079 = vpop.permute.xlu0 %2078
  %vm2080 = vcmp.eq.s32.totalorder %v2079, 1
  %v2081 = vsel %vm2080, %v2072, 0.0
  %2082 = vst [vmem:[%s5 + $0x38] sm:$0xff] %v2081
  %2083 = vst [vmem:[#allocation3] sm:$0xff] %v2072
  %2084 = vst [vmem:[#allocation4] sm:$0xff] %v2070
  // Predicated region
  $region26: #{seq2seq_encoder_forward.1} parent=0 // pred_check
    _
  $region27: #{seq2seq_encoder_forward.1} parent=0 // pred_check_branch
    %2086 = sbr.rel (0) target = $region29
  $region28: #{seq2seq_encoder_forward.1} parent=0 // pred_region
    _
  $region29: #{seq2seq_encoder_forward.1} parent=0 // pred_fallthru
    _
  // Predicated region
  $region30: #{seq2seq_encoder_forward.1} parent=0 // pred_check
    _
  $region31: #{seq2seq_encoder_forward.1} parent=0 // pred_check_branch
    %2088 = sbr.rel (0) target = $region33
  $region32: #{seq2seq_encoder_forward.1} parent=0 // pred_region
    _
  $region33: #{seq2seq_encoder_forward.1} parent=0 // pred_fallthru
    _

</llo_original>
